<compile_context>
chip_gen: v6e
topology: v6e:2x2x1
jax: 0.10.0
libtpu: 0.0.40
codegen_flags: <defaults>
</compile_context>

<pallas_src>
import math

import jax
import jax.numpy as jnp
from jax import lax
from jax.experimental import pallas as pl
from jax.experimental.pallas import tpu as pltpu

# ------------- synthetic "mt5-small-ish" config (small, lane-dense) -------------
VOCAB = 128
D_MODEL = 128
N_HEADS = 4
D_KV = 32                    # inner dim = N_HEADS * D_KV = 128 = D_MODEL
INNER = N_HEADS * D_KV
D_FF = 256
N_LAYERS = 2
NUM_BUCKETS = 32
MAX_DISTANCE = 128
EPS = 1e-6
TILE_M_TARGET = 512          # rows per grid step for the row-wise kernels


def _pick_tile_m(m):
    for t in (TILE_M_TARGET, 256, 128, 64, 32, 16, 8):
        if t <= m and m % t == 0:
            return t
    return m


_PAR = pltpu.CompilerParams(dimension_semantics=("parallel",))


# ---------------------------- Pallas kernels -----------------------------

def _norm_qkv_kernel(x_ref, lnw_ref, wqkv_ref, o_ref):
    """Fused RMSNorm(ln1) + combined QKV projection.  Output bf16 [TM, 3*INNER]."""
    x = x_ref[...]                                        # f32 [TM, D]
    var = jnp.mean(x * x, axis=-1, keepdims=True)
    normed = (x * lax.rsqrt(var + EPS)) * lnw_ref[...]    # f32
    o_ref[...] = jnp.dot(normed.astype(jnp.bfloat16), wqkv_ref[...],
                         preferred_element_type=jnp.float32).astype(o_ref.dtype)


def norm_qkv(x, lnw, wqkv):
    """x: [M, D] f32, lnw: [1, D] f32, wqkv: [D, 3*INNER] bf16 -> [M, 3*INNER] bf16."""
    M, D = x.shape
    N = wqkv.shape[1]
    tm = _pick_tile_m(M)
    return pl.pallas_call(
        _norm_qkv_kernel,
        out_shape=jax.ShapeDtypeStruct((M, N), jnp.bfloat16),
        grid=(M // tm,),
        in_specs=[pl.BlockSpec((tm, D), lambda i: (i, 0)),
                  pl.BlockSpec((1, D), lambda i: (0, 0)),
                  pl.BlockSpec((D, N), lambda i: (0, 0))],
        out_specs=pl.BlockSpec((tm, N), lambda i: (i, 0)),
        compiler_params=_PAR,
    )(x, lnw, wqkv)


def _attn_block_kernel(qkv_ref, pb_ref, mb_ref, wo_ref, res_ref, o_ref):
    """Per-batch attention (all heads) + output projection + residual add.

    qkv_ref: [1, S, 3*INNER] bf16   pb_ref: [H, S, S] f32 (shared pos bias)
    mb_ref:  [1, 1, S] f32 (mask bias)   wo_ref: [INNER, D] bf16
    res_ref / o_ref: [1, S, D] f32
    """
    qkv = qkv_ref[0]                                      # [S, 3*INNER] bf16
    mask_bias = mb_ref[0]                                 # [1, S] f32
    ctx_heads = []
    for h in range(N_HEADS):
        q = qkv[:, h * D_KV:(h + 1) * D_KV]               # [S, Dh] bf16
        k = qkv[:, INNER + h * D_KV:INNER + (h + 1) * D_KV]
        v = qkv[:, 2 * INNER + h * D_KV:2 * INNER + (h + 1) * D_KV]
        # T5 does NOT scale scores by 1/sqrt(d_kv).  q @ k^T with f32 accumulate.
        scores = lax.dot_general(q, k, (((1,), (1,)), ((), ())),
                                 preferred_element_type=jnp.float32)   # [S, S]
        scores = scores + pb_ref[h] + mask_bias           # f32
        m = jnp.max(scores, axis=-1, keepdims=True)
        p = jnp.exp(scores - m)
        l = jnp.sum(p, axis=-1, keepdims=True)
        ctx = jnp.dot(p.astype(jnp.bfloat16), v,
                      preferred_element_type=jnp.float32)  # [S, Dh] f32
        # Deferred 1/l normalization; approx reciprocal goes to the idle EUP slot.
        ctx_heads.append(ctx * pl.reciprocal(l, approx=True))
    # Lane-dense [S, INNER] context, single output projection + residual.
    ctx_all = jnp.concatenate(ctx_heads, axis=-1).astype(jnp.bfloat16)
    o_ref[0] = res_ref[0] + jnp.dot(ctx_all, wo_ref[...],
                                    preferred_element_type=jnp.float32)


def attn_block(qkv, pos_bias, mask_bias, wo, residual):
    """qkv: [B,S,3*INNER] bf16; pos_bias: [H,S,S] f32; mask_bias: [B,1,S] f32;
    wo: [INNER,D] bf16; residual: [B,S,D] f32 -> [B,S,D] f32."""
    B, S, _ = qkv.shape
    D = residual.shape[-1]
    return pl.pallas_call(
        _attn_block_kernel,
        out_shape=jax.ShapeDtypeStruct((B, S, D), jnp.float32),
        grid=(B,),
        in_specs=[pl.BlockSpec((1, S, 3 * INNER), lambda b: (b, 0, 0)),
                  pl.BlockSpec((N_HEADS, S, S), lambda b: (0, 0, 0)),
                  pl.BlockSpec((1, 1, S), lambda b: (b, 0, 0)),
                  pl.BlockSpec((INNER, D), lambda b: (0, 0)),
                  pl.BlockSpec((1, S, D), lambda b: (b, 0, 0))],
        out_specs=pl.BlockSpec((1, S, D), lambda b: (b, 0, 0)),
        compiler_params=_PAR,
    )(qkv, pos_bias, mask_bias, wo, residual)


def _norm_ffn_kernel(x_ref, lnw_ref, wi_ref, wo_ref, o_ref):
    """Fused RMSNorm(ln2) + gated-GELU FFN + residual add."""
    x = x_ref[...]                                        # f32 [TM, D]
    var = jnp.mean(x * x, axis=-1, keepdims=True)
    normed = ((x * lax.rsqrt(var + EPS)) * lnw_ref[...]).astype(jnp.bfloat16)
    h = jnp.dot(normed, wi_ref[...],
                preferred_element_type=jnp.float32)        # [TM, 2*D_FF] f32
    h_g = h[:, :D_FF]
    h_l = h[:, D_FF:]
    # gelu_new (tanh approximation) in f32 (v5e has no bf16 VPU/EUP).
    g = 0.5 * h_g * (1.0 + jnp.tanh(
        0.7978845608028654 * (h_g + 0.044715 * h_g * h_g * h_g)))
    hh = (g * h_l).astype(jnp.bfloat16)
    o_ref[...] = x + jnp.dot(hh, wo_ref[...],
                             preferred_element_type=jnp.float32)


def norm_ffn(x, lnw, wi, wo):
    """x: [M, D] f32, wi: [D, 2*D_FF] bf16, wo: [D_FF, D] bf16 -> [M, D] f32."""
    M, D = x.shape
    F2 = wi.shape[1]
    F = wo.shape[0]
    tm = _pick_tile_m(M)
    return pl.pallas_call(
        _norm_ffn_kernel,
        out_shape=jax.ShapeDtypeStruct((M, D), jnp.float32),
        grid=(M // tm,),
        in_specs=[pl.BlockSpec((tm, D), lambda i: (i, 0)),
                  pl.BlockSpec((1, D), lambda i: (0, 0)),
                  pl.BlockSpec((D, F2), lambda i: (0, 0)),
                  pl.BlockSpec((F, D), lambda i: (0, 0))],
        out_specs=pl.BlockSpec((tm, D), lambda i: (i, 0)),
        compiler_params=_PAR,
    )(x, lnw, wi, wo)


def _rmsnorm_kernel(x_ref, w_ref, o_ref):
    x = x_ref[...]
    var = jnp.mean(x * x, axis=-1, keepdims=True)
    o_ref[...] = (x * lax.rsqrt(var + EPS)) * w_ref[...]


def rmsnorm(x, w):
    """Final T5LayerNorm.  x: [M, D] f32, w: [1, D] f32."""
    M, D = x.shape
    tm = _pick_tile_m(M)
    return pl.pallas_call(
        _rmsnorm_kernel,
        out_shape=jax.ShapeDtypeStruct((M, D), jnp.float32),
        grid=(M // tm,),
        in_specs=[pl.BlockSpec((tm, D), lambda i: (i, 0)),
                  pl.BlockSpec((1, D), lambda i: (0, 0))],
        out_specs=pl.BlockSpec((tm, D), lambda i: (i, 0)),
        compiler_params=_PAR,
    )(x, w)


# --------------------------- JAX glue (non-hot) ---------------------------

def _relative_position_bucket(relative_position,
                              num_buckets=NUM_BUCKETS,
                              max_distance=MAX_DISTANCE):
    """Bidirectional T5 relative position bucketing (matches HF)."""
    num_buckets //= 2
    relative_buckets = (relative_position > 0).astype(jnp.int32) * num_buckets
    n = jnp.abs(relative_position)
    max_exact = num_buckets // 2
    is_small = n < max_exact
    n_safe = jnp.maximum(n, 1).astype(jnp.float32)
    val_if_large = max_exact + (
        jnp.log(n_safe / max_exact) / math.log(max_distance / max_exact)
        * (num_buckets - max_exact)
    ).astype(jnp.int32)
    val_if_large = jnp.minimum(val_if_large, num_buckets - 1)
    relative_buckets = relative_buckets + jnp.where(is_small, n, val_if_large)
    return relative_buckets


def compute_position_bias(rel_bias_table, seq_len):
    """rel_bias_table: [NUM_BUCKETS, H] -> shared bias [H, S, S] (no B broadcast)."""
    ctx = jnp.arange(seq_len)[:, None]
    mem = jnp.arange(seq_len)[None, :]
    buckets = _relative_position_bucket(mem - ctx)            # [S, S]
    values = rel_bias_table[buckets]                          # [S, S, H]
    return jnp.transpose(values, (2, 0, 1))                   # [H, S, S]


def init_params(key):
    """Deterministic synthetic weights (shapes follow T5EncoderModel config)."""
    def nrm(k, shape, scale=0.02, dtype=jnp.float32):
        return (scale * jax.random.normal(k, shape)).astype(dtype)

    keys = jax.random.split(key, 2 + N_LAYERS)
    params = {
        "embed": nrm(keys[0], (VOCAB, D_MODEL), 1.0),
        "rel_bias": nrm(keys[1], (NUM_BUCKETS, N_HEADS), 0.1),
        "ln_f": jnp.ones((1, D_MODEL), jnp.float32),
        "layers": [],
    }
    for l in range(N_LAYERS):
        kk = jax.random.split(keys[2 + l], 4)
        params["layers"].append({
            "ln1": jnp.ones((1, D_MODEL), jnp.float32),
            # fused Q/K/V weight [D, 3*INNER]  (== concat(wq, wk, wv) in HF)
            "wqkv": nrm(kk[0], (D_MODEL, 3 * INNER), dtype=jnp.bfloat16),
            "wo": nrm(kk[1], (INNER, D_MODEL), dtype=jnp.bfloat16),
            "ln2": jnp.ones((1, D_MODEL), jnp.float32),
            # fused gate/linear weight [D, 2*D_FF]  (== concat(wi_0, wi_1) in HF)
            "wi": nrm(kk[2], (D_MODEL, 2 * D_FF), dtype=jnp.bfloat16),
            "wo_ff": nrm(kk[3], (D_FF, D_MODEL), dtype=jnp.bfloat16),
        })
    return params


def t5_encoder_forward(params, input_ids, attention_mask):
    """Equivalent of T5Wrapper.forward -> last_hidden_state [B, S, D_MODEL]."""
    B, S = input_ids.shape
    # Embedding lookup (gather) stays in plain JAX.
    hidden = params["embed"][input_ids].astype(jnp.float32)       # [B, S, D]

    # Shared (layer-0) relative position bias and tiny per-batch mask bias;
    # never materialized at [B, H, S, S].
    pos_bias = compute_position_bias(params["rel_bias"], S)       # [H, S, S]
    mask_bias = ((1.0 - attention_mask.astype(jnp.float32))
                 * -1e9)[:, None, :]                              # [B, 1, S]

    x = hidden                                                    # [B, S, D] f32
    for lp in params["layers"]:
        # --- self-attention sublayer (3 fused pallas_calls per layer total) ---
        qkv = norm_qkv(x.reshape(B * S, D_MODEL), lp["ln1"], lp["wqkv"])
        x = attn_block(qkv.reshape(B, S, 3 * INNER), pos_bias, mask_bias,
                       lp["wo"], x)
        # --- feed-forward sublayer (gated GELU), residual fused in-kernel ---
        x = norm_ffn(x.reshape(B * S, D_MODEL), lp["ln2"], lp["wi"],
                     lp["wo_ff"]).reshape(B, S, D_MODEL)

    x = rmsnorm(x.reshape(B * S, D_MODEL), params["ln_f"])
    return x.reshape(B, S, D_MODEL)


# TODO(synk): pretrained-checkpoint loading (from_pretrained / cache_dir) has no
# Pallas equivalent; weights are synthetic deterministic tensors instead.

if __name__ == "__main__":
    key = jax.random.PRNGKey(0)
    pkey, ikey = jax.random.split(key)
    params = init_params(pkey)

    B, S = 2, 8
    input_ids = jax.random.randint(ikey, (B, S), 0, VOCAB, dtype=jnp.int32)
    # Right-padded attention mask: first row full, second row half padded.
    attention_mask = jnp.array(
        [[1] * S, [1] * (S // 2) + [0] * (S - S // 2)], dtype=jnp.int32)

    fwd = jax.jit(t5_encoder_forward)
    out = fwd(params, input_ids, attention_mask)
    jax.block_until_ready(out)

    assert out.shape == (B, S, D_MODEL)
    assert out.dtype == jnp.float32
    assert bool(jnp.all(jnp.isfinite(out)))
    print("KERNEL_OK")
</pallas_src>

<mosaic_0001>
module attributes {stable_mosaic.version = 11 : i64} {
  func.func @_rmsnorm_kernel(%arg0: i32, %arg1: memref<16x128xf32, #tpu.memory_space<vmem>>, %arg2: memref<1x128xf32, #tpu.memory_space<vmem>>, %arg3: memref<16x128xf32, #tpu.memory_space<vmem>>) attributes {dimension_semantics = [#tpu.dimension_semantics<parallel>], iteration_bounds = array<i64: 1>, scalar_prefetch = 0 : i64, scratch_operands = 0 : i64, tpu.core_type = #tpu.core_type<tc>, window_params = [{transform_indices = @transform_0, window_bounds = array<i64: 16, 128>}, {pipeline_mode = #tpu.pipeline_mode<synchronous>, transform_indices = @transform_1, window_bounds = array<i64: 1, 128>}, {transform_indices = @transform_2, window_bounds = array<i64: 16, 128>}]} {
    %c0 = arith.constant 0 : index
    %c0_0 = arith.constant 0 : index
    %0 = vector.load %arg1[%c0, %c0_0] : memref<16x128xf32, #tpu.memory_space<vmem>>, vector<16x128xf32>
    %1 = arith.mulf %0, %0 : vector<16x128xf32>
    %cst = arith.constant dense<0.000000e+00> : vector<16xf32>
    %2 = vector.multi_reduction <add>, %1, %cst [1] : vector<16x128xf32> to vector<16xf32>
    %3 = vector.shape_cast %2 : vector<16xf32> to vector<16x1xf32>
    %cst_1 = arith.constant 1.280000e+02 : f32
    %4 = vector.broadcast %cst_1 : f32 to vector<16x1xf32>
    %5 = arith.divf %3, %4 : vector<16x1xf32>
    %cst_2 = arith.constant 9.99999997E-7 : f32
    %6 = vector.broadcast %cst_2 : f32 to vector<16x1xf32>
    %7 = arith.addf %5, %6 : vector<16x1xf32>
    %8 = math.rsqrt %7 : vector<16x1xf32>
    %9 = vector.broadcast %8 : vector<16x1xf32> to vector<16x128xf32>
    %10 = arith.mulf %0, %9 : vector<16x128xf32>
    %c0_3 = arith.constant 0 : index
    %c0_4 = arith.constant 0 : index
    %11 = vector.load %arg2[%c0_3, %c0_4] : memref<1x128xf32, #tpu.memory_space<vmem>>, vector<1x128xf32>
    %12 = vector.broadcast %11 : vector<1x128xf32> to vector<16x128xf32>
    %13 = arith.mulf %10, %12 : vector<16x128xf32>
    %c0_5 = arith.constant 0 : index
    %c0_6 = arith.constant 0 : index
    %14 = vector.load %arg3[%c0_5, %c0_6] : memref<16x128xf32, #tpu.memory_space<vmem>>, vector<16x128xf32>
    tpu.vector_store %arg3[%c0_5, %c0_6], %13 {strides = array<i32>} : memref<16x128xf32, #tpu.memory_space<vmem>>, vector<16x128xf32>,
    return
  }
  func.func @transform_0(%arg0: i32) -> (i32, i32) {
    %c0_i32 = arith.constant 0 : i32
    %c0_i32_0 = arith.constant 0 : i32
    return %arg0, %c0_i32 : i32, i32
  }
  func.func @transform_1(%arg0: i32) -> (i32, i32) {
    %c0_i32 = arith.constant 0 : i32
    %c0_i32_0 = arith.constant 0 : i32
    %c0_i32_1 = arith.constant 0 : i32
    return %c0_i32, %c0_i32_0 : i32, i32
  }
  func.func @transform_2(%arg0: i32) -> (i32, i32) {
    %c0_i32 = arith.constant 0 : i32
    %c0_i32_0 = arith.constant 0 : i32
    return %arg0, %c0_i32 : i32, i32
  }
}

module attributes {stable_mosaic.version = 11 : i64} {
  func.func @_norm_qkv_kernel(%arg0: i32, %arg1: memref<16x128xf32, #tpu.memory_space<vmem>>, %arg2: memref<1x128xf32, #tpu.memory_space<vmem>>, %arg3: memref<128x384xbf16, #tpu.memory_space<vmem>>, %arg4: memref<16x384xbf16, #tpu.memory_space<vmem>>) attributes {dimension_semantics = [#tpu.dimension_semantics<parallel>], iteration_bounds = array<i64: 1>, scalar_prefetch = 0 : i64, scratch_operands = 0 : i64, tpu.core_type = #tpu.core_type<tc>, window_params = [{transform_indices = @transform_0, window_bounds = array<i64: 16, 128>}, {pipeline_mode = #tpu.pipeline_mode<synchronous>, transform_indices = @transform_1, window_bounds = array<i64: 1, 128>}, {pipeline_mode = #tpu.pipeline_mode<synchronous>, transform_indices = @transform_2, window_bounds = array<i64: 128, 384>}, {transform_indices = @transform_3, window_bounds = array<i64: 16, 384>}]} {
    %c0 = arith.constant 0 : index
    %c0_0 = arith.constant 0 : index
    %0 = vector.load %arg1[%c0, %c0_0] : memref<16x128xf32, #tpu.memory_space<vmem>>, vector<16x128xf32>
    %1 = arith.mulf %0, %0 : vector<16x128xf32>
    %cst = arith.constant dense<0.000000e+00> : vector<16xf32>
    %2 = vector.multi_reduction <add>, %1, %cst [1] : vector<16x128xf32> to vector<16xf32>
    %3 = vector.shape_cast %2 : vector<16xf32> to vector<16x1xf32>
    %cst_1 = arith.constant 1.280000e+02 : f32
    %4 = vector.broadcast %cst_1 : f32 to vector<16x1xf32>
    %5 = arith.divf %3, %4 : vector<16x1xf32>
    %cst_2 = arith.constant 9.99999997E-7 : f32
    %6 = vector.broadcast %cst_2 : f32 to vector<16x1xf32>
    %7 = arith.addf %5, %6 : vector<16x1xf32>
    %8 = math.rsqrt %7 : vector<16x1xf32>
    %9 = vector.broadcast %8 : vector<16x1xf32> to vector<16x128xf32>
    %10 = arith.mulf %0, %9 : vector<16x128xf32>
    %c0_3 = arith.constant 0 : index
    %c0_4 = arith.constant 0 : index
    %11 = vector.load %arg2[%c0_3, %c0_4] : memref<1x128xf32, #tpu.memory_space<vmem>>, vector<1x128xf32>
    %12 = vector.broadcast %11 : vector<1x128xf32> to vector<16x128xf32>
    %13 = arith.mulf %10, %12 : vector<16x128xf32>
    %14 = arith.truncf %13 : vector<16x128xf32> to vector<16x128xbf16>
    %c0_5 = arith.constant 0 : index
    %c0_6 = arith.constant 0 : index
    %15 = vector.load %arg3[%c0_5, %c0_6] : memref<128x384xbf16, #tpu.memory_space<vmem>>, vector<128x384xbf16>
    %cst_7 = arith.constant dense<0.000000e+00> : vector<16x384xf32>
    %16 = tpu.matmul %14, %15, %cst_7 {dimension_numbers = #tpu.dot_dimension_numbers<[1], [0], [0], [1], [0, 0, 1, 1], [], []>} : vector<16x128xbf16>, vector<128x384xbf16>, vector<16x384xf32> -> vector<16x384xf32>
    %17 = arith.truncf %16 : vector<16x384xf32> to vector<16x384xbf16>
    %c0_8 = arith.constant 0 : index
    %c0_9 = arith.constant 0 : index
    %18 = vector.load %arg4[%c0_8, %c0_9] : memref<16x384xbf16, #tpu.memory_space<vmem>>, vector<16x384xbf16>
    tpu.vector_store %arg4[%c0_8, %c0_9], %17 {strides = array<i32>} : memref<16x384xbf16, #tpu.memory_space<vmem>>, vector<16x384xbf16>,
    return
  }
  func.func @transform_0(%arg0: i32) -> (i32, i32) {
    %c0_i32 = arith.constant 0 : i32
    %c0_i32_0 = arith.constant 0 : i32
    return %arg0, %c0_i32 : i32, i32
  }
  func.func @transform_1(%arg0: i32) -> (i32, i32) {
    %c0_i32 = arith.constant 0 : i32
    %c0_i32_0 = arith.constant 0 : i32
    %c0_i32_1 = arith.constant 0 : i32
    return %c0_i32, %c0_i32_0 : i32, i32
  }
  func.func @transform_2(%arg0: i32) -> (i32, i32) {
    %c0_i32 = arith.constant 0 : i32
    %c0_i32_0 = arith.constant 0 : i32
    %c0_i32_1 = arith.constant 0 : i32
    return %c0_i32, %c0_i32_0 : i32, i32
  }
  func.func @transform_3(%arg0: i32) -> (i32, i32) {
    %c0_i32 = arith.constant 0 : i32
    %c0_i32_0 = arith.constant 0 : i32
    return %arg0, %c0_i32 : i32, i32
  }
}

module attributes {stable_mosaic.version = 11 : i64} {
  func.func @_attn_block_kernel(%arg0: i32, %arg1: memref<1x8x384xbf16, #tpu.memory_space<vmem>>, %arg2: memref<4x8x8xf32, #tpu.memory_space<vmem>>, %arg3: memref<1x1x8xf32, #tpu.memory_space<vmem>>, %arg4: memref<128x128xbf16, #tpu.memory_space<vmem>>, %arg5: memref<1x8x128xf32, #tpu.memory_space<vmem>>, %arg6: memref<1x8x128xf32, #tpu.memory_space<vmem>>) attributes {dimension_semantics = [#tpu.dimension_semantics<parallel>], iteration_bounds = array<i64: 2>, scalar_prefetch = 0 : i64, scratch_operands = 0 : i64, tpu.core_type = #tpu.core_type<tc>, window_params = [{transform_indices = @transform_0, window_bounds = array<i64: 1, 8, 384>}, {pipeline_mode = #tpu.pipeline_mode<synchronous>, transform_indices = @transform_1, window_bounds = array<i64: 4, 8, 8>}, {transform_indices = @transform_2, window_bounds = array<i64: 1, 1, 8>}, {pipeline_mode = #tpu.pipeline_mode<synchronous>, transform_indices = @transform_3, window_bounds = array<i64: 128, 128>}, {transform_indices = @transform_4, window_bounds = array<i64: 1, 8, 128>}, {transform_indices = @transform_5, window_bounds = array<i64: 1, 8, 128>}]} {
    %c0 = arith.constant 0 : index
    %c0_0 = arith.constant 0 : index
    %c0_1 = arith.constant 0 : index
    %0 = vector.load %arg1[%c0, %c0_0, %c0_1] : memref<1x8x384xbf16, #tpu.memory_space<vmem>>, vector<1x8x384xbf16>
    %1 = vector.shape_cast %0 : vector<1x8x384xbf16> to vector<8x384xbf16>
    %c0_2 = arith.constant 0 : index
    %c0_3 = arith.constant 0 : index
    %c0_4 = arith.constant 0 : index
    %2 = vector.load %arg3[%c0_2, %c0_3, %c0_4] : memref<1x1x8xf32, #tpu.memory_space<vmem>>, vector<1x1x8xf32>
    %3 = vector.shape_cast %2 : vector<1x1x8xf32> to vector<1x8xf32>
    %4 = vector.extract_strided_slice %1 {offsets = [0, 0], sizes = [8, 32], strides = [1, 1]} : vector<8x384xbf16> to vector<8x32xbf16>
    %5 = vector.extract_strided_slice %1 {offsets = [0, 128], sizes = [8, 32], strides = [1, 1]} : vector<8x384xbf16> to vector<8x32xbf16>
    %6 = vector.extract_strided_slice %1 {offsets = [0, 256], sizes = [8, 32], strides = [1, 1]} : vector<8x384xbf16> to vector<8x32xbf16>
    %cst = arith.constant dense<0.000000e+00> : vector<8x8xf32>
    %7 = tpu.matmul %4, %5, %cst {dimension_numbers = #tpu.dot_dimension_numbers<[1], [1], [0], [0], [0, 0, 1, 0], [], []>} : vector<8x32xbf16>, vector<8x32xbf16>, vector<8x8xf32> -> vector<8x8xf32>
    %c0_5 = arith.constant 0 : index
    %c0_6 = arith.constant 0 : index
    %c0_7 = arith.constant 0 : index
    %8 = vector.load %arg2[%c0_5, %c0_6, %c0_7] : memref<4x8x8xf32, #tpu.memory_space<vmem>>, vector<1x8x8xf32>
    %9 = vector.shape_cast %8 : vector<1x8x8xf32> to vector<8x8xf32>
    %10 = arith.addf %7, %9 : vector<8x8xf32>
    %11 = vector.broadcast %3 : vector<1x8xf32> to vector<8x8xf32>
    %12 = arith.addf %10, %11 : vector<8x8xf32>
    %cst_8 = arith.constant dense<0xFF800000> : vector<8xf32>
    %13 = vector.multi_reduction <maximumf>, %12, %cst_8 [1] : vector<8x8xf32> to vector<8xf32>
    %14 = vector.shape_cast %13 : vector<8xf32> to vector<8x1xf32>
    %15 = vector.broadcast %14 : vector<8x1xf32> to vector<8x8xf32>
    %16 = arith.subf %12, %15 : vector<8x8xf32>
    %17 = math.exp %16 : vector<8x8xf32>
    %cst_9 = arith.constant dense<0.000000e+00> : vector<8xf32>
    %18 = vector.multi_reduction <add>, %17, %cst_9 [1] : vector<8x8xf32> to vector<8xf32>
    %19 = vector.shape_cast %18 : vector<8xf32> to vector<8x1xf32>
    %20 = arith.truncf %17 : vector<8x8xf32> to vector<8x8xbf16>
    %cst_10 = arith.constant dense<0.000000e+00> : vector<8x32xf32>
    %21 = tpu.matmul %20, %6, %cst_10 {dimension_numbers = #tpu.dot_dimension_numbers<[1], [0], [0], [1], [0, 0, 1, 1], [], []>} : vector<8x8xbf16>, vector<8x32xbf16>, vector<8x32xf32> -> vector<8x32xf32>
    %22 = tpu.reciprocal %19 {approx = true} : vector<8x1xf32> -> vector<8x1xf32>
    %23 = vector.broadcast %22 : vector<8x1xf32> to vector<8x32xf32>
    %24 = arith.mulf %21, %23 : vector<8x32xf32>
    %25 = vector.extract_strided_slice %1 {offsets = [0, 32], sizes = [8, 32], strides = [1, 1]} : vector<8x384xbf16> to vector<8x32xbf16>
    %26 = vector.extract_strided_slice %1 {offsets = [0, 160], sizes = [8, 32], strides = [1, 1]} : vector<8x384xbf16> to vector<8x32xbf16>
    %27 = vector.extract_strided_slice %1 {offsets = [0, 288], sizes = [8, 32], strides = [1, 1]} : vector<8x384xbf16> to vector<8x32xbf16>
    %cst_11 = arith.constant dense<0.000000e+00> : vector<8x8xf32>
    %28 = tpu.matmul %25, %26, %cst_11 {dimension_numbers = #tpu.dot_dimension_numbers<[1], [1], [0], [0], [0, 0, 1, 0], [], []>} : vector<8x32xbf16>, vector<8x32xbf16>, vector<8x8xf32> -> vector<8x8xf32>
    %c1 = arith.constant 1 : index
    %c0_12 = arith.constant 0 : index
    %c0_13 = arith.constant 0 : index
    %29 = vector.load %arg2[%c1, %c0_12, %c0_13] : memref<4x8x8xf32, #tpu.memory_space<vmem>>, vector<1x8x8xf32>
    %30 = vector.shape_cast %29 : vector<1x8x8xf32> to vector<8x8xf32>
    %31 = arith.addf %28, %30 : vector<8x8xf32>
    %32 = vector.broadcast %3 : vector<1x8xf32> to vector<8x8xf32>
    %33 = arith.addf %31, %32 : vector<8x8xf32>
    %cst_14 = arith.constant dense<0xFF800000> : vector<8xf32>
    %34 = vector.multi_reduction <maximumf>, %33, %cst_14 [1] : vector<8x8xf32> to vector<8xf32>
    %35 = vector.shape_cast %34 : vector<8xf32> to vector<8x1xf32>
    %36 = vector.broadcast %35 : vector<8x1xf32> to vector<8x8xf32>
    %37 = arith.subf %33, %36 : vector<8x8xf32>
    %38 = math.exp %37 : vector<8x8xf32>
    %cst_15 = arith.constant dense<0.000000e+00> : vector<8xf32>
    %39 = vector.multi_reduction <add>, %38, %cst_15 [1] : vector<8x8xf32> to vector<8xf32>
    %40 = vector.shape_cast %39 : vector<8xf32> to vector<8x1xf32>
    %41 = arith.truncf %38 : vector<8x8xf32> to vector<8x8xbf16>
    %cst_16 = arith.constant dense<0.000000e+00> : vector<8x32xf32>
    %42 = tpu.matmul %41, %27, %cst_16 {dimension_numbers = #tpu.dot_dimension_numbers<[1], [0], [0], [1], [0, 0, 1, 1], [], []>} : vector<8x8xbf16>, vector<8x32xbf16>, vector<8x32xf32> -> vector<8x32xf32>
    %43 = tpu.reciprocal %40 {approx = true} : vector<8x1xf32> -> vector<8x1xf32>
    %44 = vector.broadcast %43 : vector<8x1xf32> to vector<8x32xf32>
    %45 = arith.mulf %42, %44 : vector<8x32xf32>
    %46 = vector.extract_strided_slice %1 {offsets = [0, 64], sizes = [8, 32], strides = [1, 1]} : vector<8x384xbf16> to vector<8x32xbf16>
    %47 = vector.extract_strided_slice %1 {offsets = [0, 192], sizes = [8, 32], strides = [1, 1]} : vector<8x384xbf16> to vector<8x32xbf16>
    %48 = vector.extract_strided_slice %1 {offsets = [0, 320], sizes = [8, 32], strides = [1, 1]} : vector<8x384xbf16> to vector<8x32xbf16>
    %cst_17 = arith.constant dense<0.000000e+00> : vector<8x8xf32>
    %49 = tpu.matmul %46, %47, %cst_17 {dimension_numbers = #tpu.dot_dimension_numbers<[1], [1], [0], [0], [0, 0, 1, 0], [], []>} : vector<8x32xbf16>, vector<8x32xbf16>, vector<8x8xf32> -> vector<8x8xf32>
    %c2 = arith.constant 2 : index
    %c0_18 = arith.constant 0 : index
    %c0_19 = arith.constant 0 : index
    %50 = vector.load %arg2[%c2, %c0_18, %c0_19] : memref<4x8x8xf32, #tpu.memory_space<vmem>>, vector<1x8x8xf32>
    %51 = vector.shape_cast %50 : vector<1x8x8xf32> to vector<8x8xf32>
    %52 = arith.addf %49, %51 : vector<8x8xf32>
    %53 = vector.broadcast %3 : vector<1x8xf32> to vector<8x8xf32>
    %54 = arith.addf %52, %53 : vector<8x8xf32>
    %cst_20 = arith.constant dense<0xFF800000> : vector<8xf32>
    %55 = vector.multi_reduction <maximumf>, %54, %cst_20 [1] : vector<8x8xf32> to vector<8xf32>
    %56 = vector.shape_cast %55 : vector<8xf32> to vector<8x1xf32>
    %57 = vector.broadcast %56 : vector<8x1xf32> to vector<8x8xf32>
    %58 = arith.subf %54, %57 : vector<8x8xf32>
    %59 = math.exp %58 : vector<8x8xf32>
    %cst_21 = arith.constant dense<0.000000e+00> : vector<8xf32>
    %60 = vector.multi_reduction <add>, %59, %cst_21 [1] : vector<8x8xf32> to vector<8xf32>
    %61 = vector.shape_cast %60 : vector<8xf32> to vector<8x1xf32>
    %62 = arith.truncf %59 : vector<8x8xf32> to vector<8x8xbf16>
    %cst_22 = arith.constant dense<0.000000e+00> : vector<8x32xf32>
    %63 = tpu.matmul %62, %48, %cst_22 {dimension_numbers = #tpu.dot_dimension_numbers<[1], [0], [0], [1], [0, 0, 1, 1], [], []>} : vector<8x8xbf16>, vector<8x32xbf16>, vector<8x32xf32> -> vector<8x32xf32>
    %64 = tpu.reciprocal %61 {approx = true} : vector<8x1xf32> -> vector<8x1xf32>
    %65 = vector.broadcast %64 : vector<8x1xf32> to vector<8x32xf32>
    %66 = arith.mulf %63, %65 : vector<8x32xf32>
    %67 = vector.extract_strided_slice %1 {offsets = [0, 96], sizes = [8, 32], strides = [1, 1]} : vector<8x384xbf16> to vector<8x32xbf16>
    %68 = vector.extract_strided_slice %1 {offsets = [0, 224], sizes = [8, 32], strides = [1, 1]} : vector<8x384xbf16> to vector<8x32xbf16>
    %69 = vector.extract_strided_slice %1 {offsets = [0, 352], sizes = [8, 32], strides = [1, 1]} : vector<8x384xbf16> to vector<8x32xbf16>
    %cst_23 = arith.constant dense<0.000000e+00> : vector<8x8xf32>
    %70 = tpu.matmul %67, %68, %cst_23 {dimension_numbers = #tpu.dot_dimension_numbers<[1], [1], [0], [0], [0, 0, 1, 0], [], []>} : vector<8x32xbf16>, vector<8x32xbf16>, vector<8x8xf32> -> vector<8x8xf32>
    %c3 = arith.constant 3 : index
    %c0_24 = arith.constant 0 : index
    %c0_25 = arith.constant 0 : index
    %71 = vector.load %arg2[%c3, %c0_24, %c0_25] : memref<4x8x8xf32, #tpu.memory_space<vmem>>, vector<1x8x8xf32>
    %72 = vector.shape_cast %71 : vector<1x8x8xf32> to vector<8x8xf32>
    %73 = arith.addf %70, %72 : vector<8x8xf32>
    %74 = vector.broadcast %3 : vector<1x8xf32> to vector<8x8xf32>
    %75 = arith.addf %73, %74 : vector<8x8xf32>
    %cst_26 = arith.constant dense<0xFF800000> : vector<8xf32>
    %76 = vector.multi_reduction <maximumf>, %75, %cst_26 [1] : vector<8x8xf32> to vector<8xf32>
    %77 = vector.shape_cast %76 : vector<8xf32> to vector<8x1xf32>
    %78 = vector.broadcast %77 : vector<8x1xf32> to vector<8x8xf32>
    %79 = arith.subf %75, %78 : vector<8x8xf32>
    %80 = math.exp %79 : vector<8x8xf32>
    %cst_27 = arith.constant dense<0.000000e+00> : vector<8xf32>
    %81 = vector.multi_reduction <add>, %80, %cst_27 [1] : vector<8x8xf32> to vector<8xf32>
    %82 = vector.shape_cast %81 : vector<8xf32> to vector<8x1xf32>
    %83 = arith.truncf %80 : vector<8x8xf32> to vector<8x8xbf16>
    %cst_28 = arith.constant dense<0.000000e+00> : vector<8x32xf32>
    %84 = tpu.matmul %83, %69, %cst_28 {dimension_numbers = #tpu.dot_dimension_numbers<[1], [0], [0], [1], [0, 0, 1, 1], [], []>} : vector<8x8xbf16>, vector<8x32xbf16>, vector<8x32xf32> -> vector<8x32xf32>
    %85 = tpu.reciprocal %82 {approx = true} : vector<8x1xf32> -> vector<8x1xf32>
    %86 = vector.broadcast %85 : vector<8x1xf32> to vector<8x32xf32>
    %87 = arith.mulf %84, %86 : vector<8x32xf32>
    %88 = tpu.concatenate %24, %45, %66, %87 in 1 : vector<8x32xf32>, vector<8x32xf32>, vector<8x32xf32>, vector<8x32xf32> -> vector<8x128xf32>
    %89 = arith.truncf %88 : vector<8x128xf32> to vector<8x128xbf16>
    %c0_29 = arith.constant 0 : index
    %c0_30 = arith.constant 0 : index
    %c0_31 = arith.constant 0 : index
    %90 = vector.load %arg5[%c0_29, %c0_30, %c0_31] : memref<1x8x128xf32, #tpu.memory_space<vmem>>, vector<1x8x128xf32>
    %91 = vector.shape_cast %90 : vector<1x8x128xf32> to vector<8x128xf32>
    %c0_32 = arith.constant 0 : index
    %c0_33 = arith.constant 0 : index
    %92 = vector.load %arg4[%c0_32, %c0_33] : memref<128x128xbf16, #tpu.memory_space<vmem>>, vector<128x128xbf16>
    %cst_34 = arith.constant dense<0.000000e+00> : vector<8x128xf32>
    %93 = tpu.matmul %89, %92, %cst_34 {dimension_numbers = #tpu.dot_dimension_numbers<[1], [0], [0], [1], [0, 0, 1, 1], [], []>} : vector<8x128xbf16>, vector<128x128xbf16>, vector<8x128xf32> -> vector<8x128xf32>
    %94 = arith.addf %91, %93 : vector<8x128xf32>
    %c0_35 = arith.constant 0 : index
    %c0_36 = arith.constant 0 : index
    %c0_37 = arith.constant 0 : index
    %95 = vector.load %arg6[%c0_35, %c0_36, %c0_37] : memref<1x8x128xf32, #tpu.memory_space<vmem>>, vector<1x8x128xf32>
    %96 = vector.shape_cast %95 : vector<1x8x128xf32> to vector<8x128xf32>
    %97 = vector.shape_cast %94 : vector<8x128xf32> to vector<1x8x128xf32>
    tpu.vector_store %arg6[%c0_35, %c0_36, %c0_37], %97 {strides = array<i32>} : memref<1x8x128xf32, #tpu.memory_space<vmem>>, vector<1x8x128xf32>,
    return
  }
  func.func @transform_0(%arg0: i32) -> (i32, i32, i32) {
    %c0_i32 = arith.constant 0 : i32
    %c0_i32_0 = arith.constant 0 : i32
    %c0_i32_1 = arith.constant 0 : i32
    return %arg0, %c0_i32, %c0_i32_0 : i32, i32, i32
  }
  func.func @transform_1(%arg0: i32) -> (i32, i32, i32) {
    %c0_i32 = arith.constant 0 : i32
    %c0_i32_0 = arith.constant 0 : i32
    %c0_i32_1 = arith.constant 0 : i32
    %c0_i32_2 = arith.constant 0 : i32
    return %c0_i32, %c0_i32_0, %c0_i32_1 : i32, i32, i32
  }
  func.func @transform_2(%arg0: i32) -> (i32, i32, i32) {
    %c0_i32 = arith.constant 0 : i32
    %c0_i32_0 = arith.constant 0 : i32
    %c0_i32_1 = arith.constant 0 : i32
    return %arg0, %c0_i32, %c0_i32_0 : i32, i32, i32
  }
  func.func @transform_3(%arg0: i32) -> (i32, i32) {
    %c0_i32 = arith.constant 0 : i32
    %c0_i32_0 = arith.constant 0 : i32
    %c0_i32_1 = arith.constant 0 : i32
    return %c0_i32, %c0_i32_0 : i32, i32
  }
  func.func @transform_4(%arg0: i32) -> (i32, i32, i32) {
    %c0_i32 = arith.constant 0 : i32
    %c0_i32_0 = arith.constant 0 : i32
    %c0_i32_1 = arith.constant 0 : i32
    return %arg0, %c0_i32, %c0_i32_0 : i32, i32, i32
  }
  func.func @transform_5(%arg0: i32) -> (i32, i32, i32) {
    %c0_i32 = arith.constant 0 : i32
    %c0_i32_0 = arith.constant 0 : i32
    %c0_i32_1 = arith.constant 0 : i32
    return %arg0, %c0_i32, %c0_i32_0 : i32, i32, i32
  }
}

module attributes {stable_mosaic.version = 11 : i64} {
  func.func @_norm_ffn_kernel(%arg0: i32, %arg1: memref<16x128xf32, #tpu.memory_space<vmem>>, %arg2: memref<1x128xf32, #tpu.memory_space<vmem>>, %arg3: memref<128x512xbf16, #tpu.memory_space<vmem>>, %arg4: memref<256x128xbf16, #tpu.memory_space<vmem>>, %arg5: memref<16x128xf32, #tpu.memory_space<vmem>>) attributes {dimension_semantics = [#tpu.dimension_semantics<parallel>], iteration_bounds = array<i64: 1>, scalar_prefetch = 0 : i64, scratch_operands = 0 : i64, tpu.core_type = #tpu.core_type<tc>, window_params = [{transform_indices = @transform_0, window_bounds = array<i64: 16, 128>}, {pipeline_mode = #tpu.pipeline_mode<synchronous>, transform_indices = @transform_1, window_bounds = array<i64: 1, 128>}, {pipeline_mode = #tpu.pipeline_mode<synchronous>, transform_indices = @transform_2, window_bounds = array<i64: 128, 512>}, {pipeline_mode = #tpu.pipeline_mode<synchronous>, transform_indices = @transform_3, window_bounds = array<i64: 256, 128>}, {transform_indices = @transform_4, window_bounds = array<i64: 16, 128>}]} {
    %c0 = arith.constant 0 : index
    %c0_0 = arith.constant 0 : index
    %0 = vector.load %arg1[%c0, %c0_0] : memref<16x128xf32, #tpu.memory_space<vmem>>, vector<16x128xf32>
    %1 = arith.mulf %0, %0 : vector<16x128xf32>
    %cst = arith.constant dense<0.000000e+00> : vector<16xf32>
    %2 = vector.multi_reduction <add>, %1, %cst [1] : vector<16x128xf32> to vector<16xf32>
    %3 = vector.shape_cast %2 : vector<16xf32> to vector<16x1xf32>
    %cst_1 = arith.constant 1.280000e+02 : f32
    %4 = vector.broadcast %cst_1 : f32 to vector<16x1xf32>
    %5 = arith.divf %3, %4 : vector<16x1xf32>
    %cst_2 = arith.constant 9.99999997E-7 : f32
    %6 = vector.broadcast %cst_2 : f32 to vector<16x1xf32>
    %7 = arith.addf %5, %6 : vector<16x1xf32>
    %8 = math.rsqrt %7 : vector<16x1xf32>
    %9 = vector.broadcast %8 : vector<16x1xf32> to vector<16x128xf32>
    %10 = arith.mulf %0, %9 : vector<16x128xf32>
    %c0_3 = arith.constant 0 : index
    %c0_4 = arith.constant 0 : index
    %11 = vector.load %arg2[%c0_3, %c0_4] : memref<1x128xf32, #tpu.memory_space<vmem>>, vector<1x128xf32>
    %12 = vector.broadcast %11 : vector<1x128xf32> to vector<16x128xf32>
    %13 = arith.mulf %10, %12 : vector<16x128xf32>
    %14 = arith.truncf %13 : vector<16x128xf32> to vector<16x128xbf16>
    %c0_5 = arith.constant 0 : index
    %c0_6 = arith.constant 0 : index
    %15 = vector.load %arg3[%c0_5, %c0_6] : memref<128x512xbf16, #tpu.memory_space<vmem>>, vector<128x512xbf16>
    %cst_7 = arith.constant dense<0.000000e+00> : vector<16x512xf32>
    %16 = tpu.matmul %14, %15, %cst_7 {dimension_numbers = #tpu.dot_dimension_numbers<[1], [0], [0], [1], [0, 0, 1, 1], [], []>} : vector<16x128xbf16>, vector<128x512xbf16>, vector<16x512xf32> -> vector<16x512xf32>
    %17 = vector.extract_strided_slice %16 {offsets = [0, 0], sizes = [16, 256], strides = [1, 1]} : vector<16x512xf32> to vector<16x256xf32>
    %18 = vector.extract_strided_slice %16 {offsets = [0, 256], sizes = [16, 256], strides = [1, 1]} : vector<16x512xf32> to vector<16x256xf32>
    %cst_8 = arith.constant 5.000000e-01 : f32
    %19 = vector.broadcast %cst_8 : f32 to vector<16x256xf32>
    %20 = arith.mulf %19, %17 : vector<16x256xf32>
    %cst_9 = arith.constant 4.471500e-02 : f32
    %21 = vector.broadcast %cst_9 : f32 to vector<16x256xf32>
    %22 = arith.mulf %21, %17 : vector<16x256xf32>
    %23 = arith.mulf %22, %17 : vector<16x256xf32>
    %24 = arith.mulf %23, %17 : vector<16x256xf32>
    %25 = arith.addf %17, %24 : vector<16x256xf32>
    %cst_10 = arith.constant 0.797884583 : f32
    %26 = vector.broadcast %cst_10 : f32 to vector<16x256xf32>
    %27 = arith.mulf %26, %25 : vector<16x256xf32>
    %28 = math.tanh %27 : vector<16x256xf32>
    %cst_11 = arith.constant 1.000000e+00 : f32
    %29 = vector.broadcast %cst_11 : f32 to vector<16x256xf32>
    %30 = arith.addf %29, %28 : vector<16x256xf32>
    %31 = arith.mulf %20, %30 : vector<16x256xf32>
    %32 = arith.mulf %31, %18 : vector<16x256xf32>
    %33 = arith.truncf %32 : vector<16x256xf32> to vector<16x256xbf16>
    %c0_12 = arith.constant 0 : index
    %c0_13 = arith.constant 0 : index
    %34 = vector.load %arg4[%c0_12, %c0_13] : memref<256x128xbf16, #tpu.memory_space<vmem>>, vector<256x128xbf16>
    %cst_14 = arith.constant dense<0.000000e+00> : vector<16x128xf32>
    %35 = tpu.matmul %33, %34, %cst_14 {dimension_numbers = #tpu.dot_dimension_numbers<[1], [0], [0], [1], [0, 0, 1, 1], [], []>} : vector<16x256xbf16>, vector<256x128xbf16>, vector<16x128xf32> -> vector<16x128xf32>
    %36 = arith.addf %0, %35 : vector<16x128xf32>
    %c0_15 = arith.constant 0 : index
    %c0_16 = arith.constant 0 : index
    %37 = vector.load %arg5[%c0_15, %c0_16] : memref<16x128xf32, #tpu.memory_space<vmem>>, vector<16x128xf32>
    tpu.vector_store %arg5[%c0_15, %c0_16], %36 {strides = array<i32>} : memref<16x128xf32, #tpu.memory_space<vmem>>, vector<16x128xf32>,
    return
  }
  func.func @transform_0(%arg0: i32) -> (i32, i32) {
    %c0_i32 = arith.constant 0 : i32
    %c0_i32_0 = arith.constant 0 : i32
    return %arg0, %c0_i32 : i32, i32
  }
  func.func @transform_1(%arg0: i32) -> (i32, i32) {
    %c0_i32 = arith.constant 0 : i32
    %c0_i32_0 = arith.constant 0 : i32
    %c0_i32_1 = arith.constant 0 : i32
    return %c0_i32, %c0_i32_0 : i32, i32
  }
  func.func @transform_2(%arg0: i32) -> (i32, i32) {
    %c0_i32 = arith.constant 0 : i32
    %c0_i32_0 = arith.constant 0 : i32
    %c0_i32_1 = arith.constant 0 : i32
    return %c0_i32, %c0_i32_0 : i32, i32
  }
  func.func @transform_3(%arg0: i32) -> (i32, i32) {
    %c0_i32 = arith.constant 0 : i32
    %c0_i32_0 = arith.constant 0 : i32
    %c0_i32_1 = arith.constant 0 : i32
    return %c0_i32, %c0_i32_0 : i32, i32
  }
  func.func @transform_4(%arg0: i32) -> (i32, i32) {
    %c0_i32 = arith.constant 0 : i32
    %c0_i32_0 = arith.constant 0 : i32
    return %arg0, %c0_i32 : i32, i32
  }
}

</mosaic_0001>

<llo_original>
// kernel: t5_encoder_forward.13
$region0: #{t5_encoder_forward.13}
  #allocation0 [shape = 'u32[]', space=smem, size = 0x4, offset = 0x4, fixed_abs, tag = 'smem constant byte address 0x4 - core index']
  #allocation1 [shape = 'u32[144,128]{1,0:T(1,128)}', space=vmem, size = 0x12000, scoped, tag = 'internal scratch']
  %s0 = inlined_call_operand.vmem [shape: f32[16,128], index: 0, kind: input, shape index: {}]
  %s1 = inlined_call_operand.vmem [shape: f32[1,128], index: 1, kind: input, shape index: {}]
  %s2 = inlined_call_operand.hbm [shape: f32[16,128], index: 2, kind: output, shape index: {}]
  %s3 = sld [smem:[#allocation0]]
  $region18: #{t5_encoder_forward.13} parent=0
    _
  %s5 = ssub.s32 1, %s3
  %s6 = scalar_select 0, %s5, %s3
  $region1: #{t5_encoder_forward.13} parent=0
    #allocation2 [shape = 'u8[8192]{0}', space=vmem, size = 0x2000, scoped, tag = 'output window, operand 0, single buffered']
    #allocation3 [shape = 's32[1]{0}', space=sflag, size = 0x4, scoped, tag = 'scoped memory for t5_encoder_forward.13']
    %7 = vsyncpa [#allocation3], 0
    // Predicated region
    $region2: #{t5_encoder_forward.13} parent=1 // pred_check
      _
    $region3: #{t5_encoder_forward.13} parent=1 // pred_check_branch
      %9 = sbr.rel (0) target = $region5
    $region4: #{t5_encoder_forward.13} parent=1 // pred_region
      _
    $region5: #{t5_encoder_forward.13} parent=1 // pred_fallthru
      _
    // Predicated region
    $region6: #{t5_encoder_forward.13} parent=1 // pred_check
      _
    $region7: #{t5_encoder_forward.13} parent=1 // pred_check_branch
      %11 = sbr.rel (0) target = $region9
    $region8: #{t5_encoder_forward.13} parent=1 // pred_region
      _
    $region9: #{t5_encoder_forward.13} parent=1 // pred_fallthru
      _
    %v12 = vld [vmem:[%s0] sm:$0xff]
    %v13 = vld [vmem:[%s0 + $0x8] sm:$0xff]
    %v14 = vmul.f32 %v12, %v12
    %v15 = vmul.f32 %v13, %v13
    %16 = vadd.xlane.f32.xlu0 %v14
    %v17 = vpop.xlane.xlu0 %16
    %18 = vadd.xlane.f32.xlu0 %v15
    %v19 = vpop.xlane.xlu0 %18
    %v20 = vrcp.pop 128.0
    %v21 = vmul.f32 %v17, %v20
    %v22 = vmul.f32 %v19, %v20
    %v23 = vadd.f32 %v21, 1e-06
    %v24 = vadd.f32 %v22, 1e-06
    %v25 = vrsqrt.pop %v23
    %v26 = vrsqrt.pop %v24
    %v27 = vmul.f32 %v12, %v25
    %v28 = vmul.f32 %v13, %v26
    %v29 = vld [vmem:[%s1] sm:$0x1]
    %v31 = vlaneseq
    %v32 = vshrl.u32 %v31, 7
    %v33 = vsub.s32 0, %v32
    %v34 = vrot.slane %v29, %v33
    %v36 = vmul.f32 %v27, %v34
    %v37 = vmul.f32 %v28, %v34
    %38 = vst [vmem:[#allocation2] sm:$0xff] %v36
    %39 = vst [vmem:[#allocation2 + $0x8] sm:$0xff] %v37
    // Predicated region
    $region10: #{t5_encoder_forward.13} parent=1 // pred_check
      _
    $region11: #{t5_encoder_forward.13} parent=1 // pred_check_branch
      %41 = sbr.rel (0) target = $region13
    $region12: #{t5_encoder_forward.13} parent=1 // pred_region
      %s43 = ssub.s32 256, 256
      %44 = vsyncadd [#allocation3], %s43
      %s45 = sshll.u32 [#allocation2], 4
      %s46 = int_to_ptr.vmem [resolvable:$true] %s45
      %51 = dma.vmem_to_hbm [thread:$0]  %s46, 256, %s2, [#allocation3], 128, 128, 8
    $region13: #{t5_encoder_forward.13} parent=1 // pred_fallthru
      _
    // Predicated region
    $region14: #{t5_encoder_forward.13} parent=1 // pred_check
      _
    $region15: #{t5_encoder_forward.13} parent=1 // pred_check_branch
      %53 = sbr.rel (0) target = $region17
    $region16: #{t5_encoder_forward.13} parent=1 // pred_region
      %54 = dma.done [#allocation3], 256
    $region17: #{t5_encoder_forward.13} parent=1 // pred_fallthru
      _
    %55 = vsyncpa [#allocation3], 1

// kernel: t5_encoder_forward.7
$region0: #{t5_encoder_forward.7}
  #allocation0 [shape = 'u32[]', space=smem, size = 0x4, offset = 0x4, fixed_abs, tag = 'smem constant byte address 0x4 - core index']
  #allocation1 [shape = 'u32[144,128]{1,0:T(1,128)}', space=vmem, size = 0x12000, scoped, tag = 'internal scratch']
  %s0 = inlined_call_operand.vmem [shape: f32[16,128], index: 0, kind: input, shape index: {}]
  %s1 = inlined_call_operand.vmem [shape: f32[1,128], index: 1, kind: input, shape index: {}]
  %s2 = inlined_call_operand.vmem [shape: bf16[128,384], index: 2, kind: input, shape index: {}]
  %s3 = inlined_call_operand.vmem [shape: bf16[16,384], index: 3, kind: output, shape index: {}]
  %s4 = sld [smem:[#allocation0]]
  $region22: #{t5_encoder_forward.7} parent=0
    _
  %s6 = ssub.s32 1, %s4
  %s7 = scalar_select 0, %s6, %s4
  // Predicated region
  $region2: #{t5_encoder_forward.7} parent=0 // pred_check
    _
  $region3: #{t5_encoder_forward.7} parent=0 // pred_check_branch
    %9 = sbr.rel (0) target = $region5
  $region4: #{t5_encoder_forward.7} parent=0 // pred_region
    _
  $region5: #{t5_encoder_forward.7} parent=0 // pred_fallthru
    _
  // Predicated region
  $region6: #{t5_encoder_forward.7} parent=0 // pred_check
    _
  $region7: #{t5_encoder_forward.7} parent=0 // pred_check_branch
    %11 = sbr.rel (0) target = $region9
  $region8: #{t5_encoder_forward.7} parent=0 // pred_region
    _
  $region9: #{t5_encoder_forward.7} parent=0 // pred_fallthru
    _
  // Predicated region
  $region10: #{t5_encoder_forward.7} parent=0 // pred_check
    _
  $region11: #{t5_encoder_forward.7} parent=0 // pred_check_branch
    %13 = sbr.rel (0) target = $region13
  $region12: #{t5_encoder_forward.7} parent=0 // pred_region
    _
  $region13: #{t5_encoder_forward.7} parent=0 // pred_fallthru
    _
  %v15 = vld [vmem:[%s0] sm:$0xff]
  %v16 = vld [vmem:[%s0 + $0x8] sm:$0xff]
  %v17 = vmul.f32 %v15, %v15
  %v18 = vmul.f32 %v16, %v16
  %19 = vadd.xlane.f32.xlu0 %v17
  %v20 = vpop.xlane.xlu0 %19
  %21 = vadd.xlane.f32.xlu0 %v18
  %v22 = vpop.xlane.xlu0 %21
  %v23 = vrcp.pop 128.0
  %v24 = vmul.f32 %v20, %v23
  %v25 = vmul.f32 %v22, %v23
  %v26 = vadd.f32 %v24, 1e-06
  %v27 = vadd.f32 %v25, 1e-06
  %v28 = vrsqrt.pop %v26
  %v29 = vrsqrt.pop %v27
  %v30 = vmul.f32 %v15, %v28
  %v31 = vmul.f32 %v16, %v29
  %v32 = vld [vmem:[%s1] sm:$0x1]
  %v34 = vlaneseq
  %v35 = vshrl.u32 %v34, 7
  %v36 = vsub.s32 0, %v35
  %v37 = vrot.slane %v32, %v36
  %v39 = vmul.f32 %v30, %v37
  %v40 = vmul.f32 %v31, %v37
  %v41 = vpack.c.bf16 %v40, %v39
  %v42 = vld [vmem:[%s2] sm:$0xff]
  %v43 = vld [vmem:[%s2 + $0x8] sm:$0xf]
  %v44 = vld [vmem:[%s2 + $0xc] sm:$0xff]
  %v45 = vld [vmem:[%s2 + $0x14] sm:$0xf]
  %v46 = vld [vmem:[%s2 + $0x18] sm:$0xff]
  %v47 = vld [vmem:[%s2 + $0x20] sm:$0xf]
  %v48 = vld [vmem:[%s2 + $0x24] sm:$0xff]
  %v49 = vld [vmem:[%s2 + $0x2c] sm:$0xf]
  %v50 = vld [vmem:[%s2 + $0x30] sm:$0xff]
  %v51 = vld [vmem:[%s2 + $0x38] sm:$0xf]
  %v52 = vld [vmem:[%s2 + $0x3c] sm:$0xff]
  %v53 = vld [vmem:[%s2 + $0x44] sm:$0xf]
  %v54 = vld [vmem:[%s2 + $0x48] sm:$0xff]
  %v55 = vld [vmem:[%s2 + $0x50] sm:$0xf]
  %v56 = vld [vmem:[%s2 + $0x54] sm:$0xff]
  %v57 = vld [vmem:[%s2 + $0x5c] sm:$0xf]
  %v58 = vld [vmem:[%s2 + $0x60] sm:$0xff]
  %v59 = vld [vmem:[%s2 + $0x68] sm:$0xf]
  %v60 = vld [vmem:[%s2 + $0x6c] sm:$0xff]
  %v61 = vld [vmem:[%s2 + $0x74] sm:$0xf]
  %v62 = vld [vmem:[%s2 + $0x78] sm:$0xff]
  %v63 = vld [vmem:[%s2 + $0x80] sm:$0xf]
  %v64 = vld [vmem:[%s2 + $0x84] sm:$0xff]
  %v65 = vld [vmem:[%s2 + $0x8c] sm:$0xf]
  %v66 = vld [vmem:[%s2 + $0x90] sm:$0xff]
  %v67 = vld [vmem:[%s2 + $0x98] sm:$0xf]
  %v68 = vld [vmem:[%s2 + $0x9c] sm:$0xff]
  %v69 = vld [vmem:[%s2 + $0xa4] sm:$0xf]
  %v70 = vld [vmem:[%s2 + $0xa8] sm:$0xff]
  %v71 = vld [vmem:[%s2 + $0xb0] sm:$0xf]
  %v72 = vld [vmem:[%s2 + $0xb4] sm:$0xff]
  %v73 = vld [vmem:[%s2 + $0xbc] sm:$0xf]
  %v106 = vunpack.c.l.b16 %v42
  %v107 = vunpack.c.h.b16 %v42
  %v108 = vunpack.c.l.b16 %v43
  %v109 = vunpack.c.l.b16 %v44
  %v110 = vunpack.c.h.b16 %v44
  %v111 = vunpack.c.l.b16 %v45
  %v112 = vunpack.c.l.b16 %v46
  %v113 = vunpack.c.h.b16 %v46
  %v114 = vunpack.c.l.b16 %v47
  %v115 = vunpack.c.l.b16 %v48
  %v116 = vunpack.c.h.b16 %v48
  %v117 = vunpack.c.l.b16 %v49
  %v118 = vunpack.c.l.b16 %v50
  %v119 = vunpack.c.h.b16 %v50
  %v120 = vunpack.c.l.b16 %v51
  %v121 = vunpack.c.l.b16 %v52
  %v122 = vunpack.c.h.b16 %v52
  %v123 = vunpack.c.l.b16 %v53
  %v124 = vunpack.c.l.b16 %v54
  %v125 = vunpack.c.h.b16 %v54
  %v126 = vunpack.c.l.b16 %v55
  %v127 = vunpack.c.l.b16 %v56
  %v128 = vunpack.c.h.b16 %v56
  %v129 = vunpack.c.l.b16 %v57
  %v130 = vunpack.c.l.b16 %v58
  %v131 = vunpack.c.h.b16 %v58
  %v132 = vunpack.c.l.b16 %v59
  %v133 = vunpack.c.l.b16 %v60
  %v134 = vunpack.c.h.b16 %v60
  %v135 = vunpack.c.l.b16 %v61
  %v136 = vunpack.c.l.b16 %v62
  %v137 = vunpack.c.h.b16 %v62
  %v138 = vunpack.c.l.b16 %v63
  %v139 = vunpack.c.l.b16 %v64
  %v140 = vunpack.c.h.b16 %v64
  %v141 = vunpack.c.l.b16 %v65
  %v142 = vunpack.c.l.b16 %v66
  %v143 = vunpack.c.h.b16 %v66
  %v144 = vunpack.c.l.b16 %v67
  %v145 = vunpack.c.l.b16 %v68
  %v146 = vunpack.c.h.b16 %v68
  %v147 = vunpack.c.l.b16 %v69
  %v148 = vunpack.c.l.b16 %v70
  %v149 = vunpack.c.h.b16 %v70
  %v150 = vunpack.c.l.b16 %v71
  %v151 = vunpack.c.l.b16 %v72
  %v152 = vunpack.c.h.b16 %v72
  %v153 = vunpack.c.l.b16 %v73
  %v154 = vpack.c.b16 %v109, %v106
  %v155 = vpack.c.b16 %v110, %v107
  %v156 = vpack.c.b16 %v111, %v108
  %v157 = vpack.c.b16 %v115, %v112
  %v158 = vpack.c.b16 %v116, %v113
  %v159 = vpack.c.b16 %v117, %v114
  %v160 = vpack.c.b16 %v121, %v118
  %v161 = vpack.c.b16 %v122, %v119
  %v162 = vpack.c.b16 %v123, %v120
  %v163 = vpack.c.b16 %v127, %v124
  %v164 = vpack.c.b16 %v128, %v125
  %v165 = vpack.c.b16 %v129, %v126
  %v166 = vpack.c.b16 %v133, %v130
  %v167 = vpack.c.b16 %v134, %v131
  %v168 = vpack.c.b16 %v135, %v132
  %v169 = vpack.c.b16 %v139, %v136
  %v170 = vpack.c.b16 %v140, %v137
  %v171 = vpack.c.b16 %v141, %v138
  %v172 = vpack.c.b16 %v145, %v142
  %v173 = vpack.c.b16 %v146, %v143
  %v174 = vpack.c.b16 %v147, %v144
  %v175 = vpack.c.b16 %v151, %v148
  %v176 = vpack.c.b16 %v152, %v149
  %v177 = vpack.c.b16 %v153, %v150
  %202 = vmatprep.subr.bf16.mxu0 %v176
  %203 = vmatpush1.bf16.msra.mxu0 %v175
  %204 = vmatprep.subr.bf16.mxu0 %v173
  %205 = vmatpush1.bf16.msra.mxu0 %v172
  %206 = vmatprep.subr.bf16.mxu0 %v170
  %207 = vmatpush1.bf16.msra.mxu0 %v169
  %208 = vmatprep.subr.bf16.mxu0 %v167
  %209 = vmatpush1.bf16.msra.mxu0 %v166
  %210 = vmatprep.subr.bf16.mxu0 %v164
  %211 = vmatpush1.bf16.msra.mxu0 %v163
  %212 = vmatprep.subr.bf16.mxu0 %v161
  %213 = vmatpush1.bf16.msra.mxu0 %v160
  %214 = vmatprep.subr.bf16.mxu0 %v158
  %215 = vmatpush1.bf16.msra.mxu0 %v157
  %216 = vmatprep.subr.bf16.mxu0 %v155
  %217 = vmatpush1.bf16.msra.mxu0 %v154
  %218 = vmatprep.subr.bf16.mxu0 0
  %219 = vmatpush2.bf16.msra.mxu0 0
  %220 = vmatprep.subr.bf16.mxu0 0
  %221 = vmatpush2.bf16.msra.mxu0 0
  %222 = vmatprep.subr.bf16.mxu0 0
  %223 = vmatpush2.bf16.msra.mxu0 0
  %224 = vmatprep.subr.bf16.mxu0 0
  %225 = vmatpush2.bf16.msra.mxu0 0
  %226 = vmatprep.subr.bf16.mxu0 0
  %227 = vmatpush2.bf16.msra.mxu0 0
  %228 = vmatprep.subr.bf16.mxu0 0
  %229 = vmatpush2.bf16.msra.mxu0 0
  %230 = vmatprep.subr.bf16.mxu0 0
  %231 = vmatpush2.bf16.msra.mxu0 0
  %232 = vmatprep.subr.bf16.mxu0 0
  %233 = vmatpush2.bf16.msra.mxu0 0
  %234 = vmatprep.mubr.bf16.mxu0 0
  %235 = vmatmul.mubr.bf16.gmra.mxu0 %v41
  %v236 = vpop.f32.mrf.mxu0
  %v237 = vadd.f32 0.0, %v236
  %v238 = vpop.f32.mrf.mxu0
  %v239 = vadd.f32 0.0, %v238
  %v240 = vpop.f32.mrf.mxu0
  %v241 = vadd.f32 0.0, %v240
  %v242 = vpop.f32.mrf.mxu0
  %v243 = vadd.f32 0.0, %v242
  %244 = vdwg.mxu0
  %245 = vmatprep.subr.bf16.mxu0 0
  %246 = vmatpush1.bf16.msra.mxu0 %v177
  %247 = vmatprep.subr.bf16.mxu0 0
  %248 = vmatpush1.bf16.msra.mxu0 %v174
  %249 = vmatprep.subr.bf16.mxu0 0
  %250 = vmatpush1.bf16.msra.mxu0 %v171
  %251 = vmatprep.subr.bf16.mxu0 0
  %252 = vmatpush1.bf16.msra.mxu0 %v168
  %253 = vmatprep.subr.bf16.mxu0 0
  %254 = vmatpush1.bf16.msra.mxu0 %v165
  %255 = vmatprep.subr.bf16.mxu0 0
  %256 = vmatpush1.bf16.msra.mxu0 %v162
  %257 = vmatprep.subr.bf16.mxu0 0
  %258 = vmatpush1.bf16.msra.mxu0 %v159
  %259 = vmatprep.subr.bf16.mxu0 0
  %260 = vmatpush1.bf16.msra.mxu0 %v156
  %261 = vmatprep.subr.bf16.mxu0 0
  %262 = vmatpush2.bf16.msra.mxu0 0
  %263 = vmatprep.subr.bf16.mxu0 0
  %264 = vmatpush2.bf16.msra.mxu0 0
  %265 = vmatprep.subr.bf16.mxu0 0
  %266 = vmatpush2.bf16.msra.mxu0 0
  %267 = vmatprep.subr.bf16.mxu0 0
  %268 = vmatpush2.bf16.msra.mxu0 0
  %269 = vmatprep.subr.bf16.mxu0 0
  %270 = vmatpush2.bf16.msra.mxu0 0
  %271 = vmatprep.subr.bf16.mxu0 0
  %272 = vmatpush2.bf16.msra.mxu0 0
  %273 = vmatprep.subr.bf16.mxu0 0
  %274 = vmatpush2.bf16.msra.mxu0 0
  %275 = vmatprep.subr.bf16.mxu0 0
  %276 = vmatpush2.bf16.msra.mxu0 0
  %277 = vmatprep.mubr.bf16.mxu0 0
  %278 = vmatmul.mubr.bf16.gmra.mxu0 %v41
  %v279 = vpop.f32.mrf.mxu0
  %v280 = vadd.f32 0.0, %v279
  %v281 = vpop.f32.mrf.mxu0
  %v282 = vpop.f32.mrf.mxu0
  %v283 = vadd.f32 0.0, %v282
  %v284 = vpop.f32.mrf.mxu0
  %285 = vdwg.mxu0
  %v286 = vpack.c.bf16 %v241, %v237
  %v287 = vpack.c.bf16 %v243, %v239
  %v288 = vpack.c.bf16 %v283, %v280
  %v292 = vunpack.c.l.b16 %v286
  %v293 = vunpack.c.l.b16 %v287
  %v294 = vunpack.c.l.b16 %v288
  %v295 = vunpack.c.h.b16 %v286
  %v296 = vunpack.c.h.b16 %v287
  %v297 = vunpack.c.h.b16 %v288
  %v298 = vpack.c.b16 %v293, %v292
  %v299 = vpack.c.b16 %v294, %v294
  %v300 = vpack.c.b16 %v296, %v295
  %v301 = vpack.c.b16 %v297, %v297
  %306 = vst [vmem:[%s3] sm:$0xff] %v298
  %307 = vst [vmem:[%s3 + $0x8] sm:$0xf] %v299
  %308 = vst [vmem:[%s3 + $0xc] sm:$0xff] %v300
  %309 = vst [vmem:[%s3 + $0x14] sm:$0xf] %v301
  // Predicated region
  $region14: #{t5_encoder_forward.7} parent=0 // pred_check
    _
  $region15: #{t5_encoder_forward.7} parent=0 // pred_check_branch
    %311 = sbr.rel (0) target = $region17
  $region16: #{t5_encoder_forward.7} parent=0 // pred_region
    _
  $region17: #{t5_encoder_forward.7} parent=0 // pred_fallthru
    _
  // Predicated region
  $region18: #{t5_encoder_forward.7} parent=0 // pred_check
    _
  $region19: #{t5_encoder_forward.7} parent=0 // pred_check_branch
    %313 = sbr.rel (0) target = $region21
  $region20: #{t5_encoder_forward.7} parent=0 // pred_region
    _
  $region21: #{t5_encoder_forward.7} parent=0 // pred_fallthru
    _

// kernel: t5_encoder_forward.8
$region0: #{t5_encoder_forward.8}
  #allocation0 [shape = 'u32[]', space=smem, size = 0x4, offset = 0x4, fixed_abs, tag = 'smem constant byte address 0x4 - core index']
  #allocation1 [shape = 'u32[144,128]{1,0:T(1,128)}', space=vmem, size = 0x12000, scoped, tag = 'internal scratch']
  %s0 = inlined_call_operand.vmem [shape: bf16[2,8,384], index: 0, kind: input, shape index: {}]
  %s1 = inlined_call_operand.vmem [shape: f32[4,8,8], index: 1, kind: input, shape index: {}]
  %s2 = inlined_call_operand.vmem [shape: f32[2,1,8], index: 2, kind: input, shape index: {}]
  %s3 = inlined_call_operand.vmem [shape: bf16[128,128], index: 3, kind: input, shape index: {}]
  %s4 = inlined_call_operand.vmem [shape: f32[2,8,128], index: 4, kind: input, shape index: {}]
  %s5 = inlined_call_operand.vmem [shape: f32[2,8,128], index: 5, kind: output, shape index: {}]
  %s6 = sld [smem:[#allocation0]]
  $region53: #{t5_encoder_forward.8} parent=0
    _
  %s8 = ssub.s32 1, %s6
  %s9 = scalar_select 0, %s8, %s6
  loop: start=0, step=1, limit=4
  $region2: #{t5_encoder_forward.8} parent=0 // loop_pre_header
    _
  $region3: #{t5_encoder_forward.8} parent=0 // loop_header
    %s11 = sphi 0, %s15
    %p12 = scmp.ge.s32.totalorder %s11, 4
    %s21 = sphi 0, %s23
    %s24 = sphi 0, %s21
    %s25 = sphi 0, %s24
    %s41 = sphi 0, %s25
    %s45 = sphi 0, %s45
    %s47 = sphi 0, %s45
    %s48 = sphi 0, %s47
    %s62 = sphi 0, %s48
    %s68 = sphi 0, %s70
    %s71 = sphi 0, %s68
    %s72 = sphi 0, %s71
    %s88 = sphi 0, %s72
    %s92 = sphi 0, %s92
    %s94 = sphi 0, %s92
    %s95 = sphi 0, %s94
    %s109 = sphi 0, %s95
    %s115 = sphi 0, %s117
    %s118 = sphi 0, %s115
    %s119 = sphi 0, %s118
    %s135 = sphi 0, %s119
    %s141 = sphi 0, %s143
    %s144 = sphi 0, %s141
    %s145 = sphi 0, %s144
    %s161 = sphi 0, %s145
  $region4: #{t5_encoder_forward.8} parent=0 // loop_header_branch
    %14 = sbr.rel (%p12) target = $region8
  $region5: #{t5_encoder_forward.8} parent=0 // loop_body
    %s16 = ssub.s32 %s11, 1
    %s17 = ssub.s32 %s11, 2
    %s18 = sadd.s32 %s11, 1
    %s19 = ssub.s32 %s11, %s18
    %p20 = scmp.eq.s32.totalorder %s19, 0
    %s22 = sadd.s32 %s21, 1
    %s23 = scalar_select %p20, %s21, %s22
    %p26 = pneg %p20
    %p27 = scmp.eq.s32.totalorder %s11, 1
    %p28 = por %p26, %p27
    %p29 = scmp.ne.s32.totalorder %s21, %s24
    %p30 = scmp.eq.s32.totalorder %s11, 0
    %p31 = por %p29, %p30
    %p32 = scmp.ne.s32.totalorder %s21, %s24
    %p33 = scmp.eq.s32.totalorder %s16, 1
    %p34 = por %p32, %p33
    %p35 = scmp.ne.s32.totalorder %s24, %s25
    %p36 = scmp.eq.s32.totalorder %s16, 0
    %p37 = por %p35, %p36
    %p38 = scmp.ne.s32.totalorder %s24, %s25
    %p39 = scmp.eq.s32.totalorder %s17, 1
    %p40 = por %p38, %p39
    %p42 = scmp.ne.s32.totalorder %s25, %s41
    %p43 = scmp.eq.s32.totalorder %s17, 0
    %p44 = por %p42, %p43
    %s46 = sadd.s32 %s45, 1
    %p49 = scmp.eq.s32.totalorder %s11, 1
    %p50 = scmp.ne.s32.totalorder %s45, %s47
    %p51 = scmp.eq.s32.totalorder %s11, 0
    %p52 = por %p50, %p51
    %p53 = scmp.ne.s32.totalorder %s45, %s47
    %p54 = scmp.eq.s32.totalorder %s16, 1
    %p55 = por %p53, %p54
    %p56 = scmp.ne.s32.totalorder %s47, %s48
    %p57 = scmp.eq.s32.totalorder %s16, 0
    %p58 = por %p56, %p57
    %p59 = scmp.ne.s32.totalorder %s47, %s48
    %p60 = scmp.eq.s32.totalorder %s17, 1
    %p61 = por %p59, %p60
    %p63 = scmp.ne.s32.totalorder %s48, %s62
    %p64 = scmp.eq.s32.totalorder %s17, 0
    %p65 = por %p63, %p64
    %s66 = ssub.s32 %s11, %s18
    %p67 = scmp.eq.s32.totalorder %s66, 0
    %s69 = sadd.s32 %s68, 1
    %s70 = scalar_select %p67, %s68, %s69
    %p73 = pneg %p67
    %p74 = scmp.eq.s32.totalorder %s11, 1
    %p75 = por %p73, %p74
    %p76 = scmp.ne.s32.totalorder %s68, %s71
    %p77 = scmp.eq.s32.totalorder %s11, 0
    %p78 = por %p76, %p77
    %p79 = scmp.ne.s32.totalorder %s68, %s71
    %p80 = scmp.eq.s32.totalorder %s16, 1
    %p81 = por %p79, %p80
    %p82 = scmp.ne.s32.totalorder %s71, %s72
    %p83 = scmp.eq.s32.totalorder %s16, 0
    %p84 = por %p82, %p83
    %p85 = scmp.ne.s32.totalorder %s71, %s72
    %p86 = scmp.eq.s32.totalorder %s17, 1
    %p87 = por %p85, %p86
    %p89 = scmp.ne.s32.totalorder %s72, %s88
    %p90 = scmp.eq.s32.totalorder %s17, 0
    %p91 = por %p89, %p90
    %s93 = sadd.s32 %s92, 1
    %p96 = scmp.eq.s32.totalorder %s11, 1
    %p97 = scmp.ne.s32.totalorder %s92, %s94
    %p98 = scmp.eq.s32.totalorder %s11, 0
    %p99 = por %p97, %p98
    %p100 = scmp.ne.s32.totalorder %s92, %s94
    %p101 = scmp.eq.s32.totalorder %s16, 1
    %p102 = por %p100, %p101
    %p103 = scmp.ne.s32.totalorder %s94, %s95
    %p104 = scmp.eq.s32.totalorder %s16, 0
    %p105 = por %p103, %p104
    %p106 = scmp.ne.s32.totalorder %s94, %s95
    %p107 = scmp.eq.s32.totalorder %s17, 1
    %p108 = por %p106, %p107
    %p110 = scmp.ne.s32.totalorder %s95, %s109
    %p111 = scmp.eq.s32.totalorder %s17, 0
    %p112 = por %p110, %p111
    %s113 = ssub.s32 %s11, %s18
    %p114 = scmp.eq.s32.totalorder %s113, 0
    %s116 = sadd.s32 %s115, 1
    %s117 = scalar_select %p114, %s115, %s116
    %p120 = pneg %p114
    %p121 = scmp.eq.s32.totalorder %s11, 1
    %p122 = por %p120, %p121
    %p123 = scmp.ne.s32.totalorder %s115, %s118
    %p124 = scmp.eq.s32.totalorder %s11, 0
    %p125 = por %p123, %p124
    %p126 = scmp.ne.s32.totalorder %s115, %s118
    %p127 = scmp.eq.s32.totalorder %s16, 1
    %p128 = por %p126, %p127
    %p129 = scmp.ne.s32.totalorder %s118, %s119
    %p130 = scmp.eq.s32.totalorder %s16, 0
    %p131 = por %p129, %p130
    %p132 = scmp.ne.s32.totalorder %s118, %s119
    %p133 = scmp.eq.s32.totalorder %s17, 1
    %p134 = por %p132, %p133
    %p136 = scmp.ne.s32.totalorder %s119, %s135
    %p137 = scmp.eq.s32.totalorder %s17, 0
    %p138 = por %p136, %p137
    %s139 = ssub.s32 %s11, %s18
    %p140 = scmp.eq.s32.totalorder %s139, 0
    %s142 = sadd.s32 %s141, 1
    %s143 = scalar_select %p140, %s141, %s142
    %p146 = pneg %p140
    %p147 = scmp.eq.s32.totalorder %s11, 1
    %p148 = por %p146, %p147
    %p149 = scmp.ne.s32.totalorder %s141, %s144
    %p150 = scmp.eq.s32.totalorder %s11, 0
    %p151 = por %p149, %p150
    %p152 = scmp.ne.s32.totalorder %s141, %s144
    %p153 = scmp.eq.s32.totalorder %s16, 1
    %p154 = por %p152, %p153
    %p155 = scmp.ne.s32.totalorder %s144, %s145
    %p156 = scmp.eq.s32.totalorder %s16, 0
    %p157 = por %p155, %p156
    %p158 = scmp.ne.s32.totalorder %s144, %s145
    %p159 = scmp.eq.s32.totalorder %s17, 1
    %p160 = por %p158, %p159
    %p162 = scmp.ne.s32.totalorder %s145, %s161
    %p163 = scmp.eq.s32.totalorder %s17, 0
    %p164 = por %p162, %p163
    %p165 = scmp.le.s32.totalorder 1, %s11
    %p166 = scmp.lt.s32.totalorder %s11, 3
    %p167 = pnand %p165, %p166
    %p168 = pneg %p167
    // Predicated region
    $region9: #{t5_encoder_forward.8} parent=5 // pred_check
      _
    $region10: #{t5_encoder_forward.8} parent=5 // pred_check_branch
      %170 = sbr.rel (%p167) target = $region12
    $region11: #{t5_encoder_forward.8} parent=5 // pred_region
      %s171 = ssub.s32 %s11, 1
      // Predicated region
      $region13: #{t5_encoder_forward.8} parent=11 // pred_check
        %p172 = pneg %p58
      $region14: #{t5_encoder_forward.8} parent=11 // pred_check_branch
        %174 = sbr.rel (%p172) target = $region16
      $region15: #{t5_encoder_forward.8} parent=11 // pred_region
        _
      $region16: #{t5_encoder_forward.8} parent=11 // pred_fallthru
        _
      // Predicated region
      $region17: #{t5_encoder_forward.8} parent=11 // pred_check
        %p175 = pneg %p105
      $region18: #{t5_encoder_forward.8} parent=11 // pred_check_branch
        %177 = sbr.rel (%p175) target = $region20
      $region19: #{t5_encoder_forward.8} parent=11 // pred_region
        _
      $region20: #{t5_encoder_forward.8} parent=11 // pred_fallthru
        _
    $region12: #{t5_encoder_forward.8} parent=5 // pred_fallthru
      _
    %p178 = scmp.lt.s32.totalorder %s11, 2
    // Predicated region
    $region21: #{t5_encoder_forward.8} parent=5 // pred_check
      %p179 = pneg %p178
    $region22: #{t5_encoder_forward.8} parent=5 // pred_check_branch
      %181 = sbr.rel (%p179) target = $region24
    $region23: #{t5_encoder_forward.8} parent=5 // pred_region
      // Predicated region
      $region25: #{t5_encoder_forward.8} parent=23 // pred_check
        %p182 = pneg %p31
      $region26: #{t5_encoder_forward.8} parent=23 // pred_check_branch
        %184 = sbr.rel (%p182) target = $region28
      $region27: #{t5_encoder_forward.8} parent=23 // pred_region
        %p185 = scmp.lt.s32.totalorder %s11, 1
        %s186 = scalar_select %p185, %s11, 1
        %s187 = smul.addr %s186, 3
        %s188 = smul.addr %s187, 4
        %s189 = scalar_lea.vmem %s0, %s188
      $region28: #{t5_encoder_forward.8} parent=23 // pred_fallthru
        _
      // Predicated region
      $region29: #{t5_encoder_forward.8} parent=23 // pred_check
        %p190 = pneg %p78
      $region30: #{t5_encoder_forward.8} parent=23 // pred_check_branch
        %192 = sbr.rel (%p190) target = $region32
      $region31: #{t5_encoder_forward.8} parent=23 // pred_region
        %p193 = scmp.lt.s32.totalorder %s11, 1
        %s194 = scalar_select %p193, %s11, 1
        %s195 = scalar_lea.vmem %s2, %s194
      $region32: #{t5_encoder_forward.8} parent=23 // pred_fallthru
        _
      // Predicated region
      $region33: #{t5_encoder_forward.8} parent=23 // pred_check
        %p196 = pneg %p125
      $region34: #{t5_encoder_forward.8} parent=23 // pred_check_branch
        %198 = sbr.rel (%p196) target = $region36
      $region35: #{t5_encoder_forward.8} parent=23 // pred_region
        %p199 = scmp.lt.s32.totalorder %s11, 1
        %s200 = scalar_select %p199, %s11, 1
        %s201 = smul.addr %s200, 8
        %s202 = scalar_lea.vmem %s4, %s201
      $region36: #{t5_encoder_forward.8} parent=23 // pred_fallthru
        _
    $region24: #{t5_encoder_forward.8} parent=5 // pred_fallthru
      _
    %p203 = scmp.le.s32.totalorder 1, %s11
    %p204 = scmp.lt.s32.totalorder %s11, 3
    %p205 = pnand %p203, %p204
    %p206 = pneg %p205
    // Predicated region
    $region37: #{t5_encoder_forward.8} parent=5 // pred_check
      _
    $region38: #{t5_encoder_forward.8} parent=5 // pred_check_branch
      %208 = sbr.rel (%p205) target = $region40
    $region39: #{t5_encoder_forward.8} parent=5 // pred_region
      %s209 = ssub.s32 %s11, 1
      %p210 = scmp.lt.s32.totalorder %s16, 1
      %s211 = scalar_select %p210, %s16, 1
      %s212 = smul.addr %s211, 3
      %s213 = smul.addr %s212, 4
      %s214 = scalar_lea.vmem %s0, %s213
      %p215 = pneg %p37
      %p216 = pneg %p34
      %p217 = pneg %p58
      %p218 = pneg %p55
      %p219 = scmp.lt.s32.totalorder %s16, 1
      %s220 = scalar_select %p219, %s16, 1
      %s221 = scalar_lea.vmem %s2, %s220
      %p222 = pneg %p84
      %p223 = pneg %p81
      %p224 = pneg %p105
      %p225 = pneg %p102
      %p226 = scmp.lt.s32.totalorder %s16, 1
      %s227 = scalar_select %p226, %s16, 1
      %s228 = smul.addr %s227, 8
      %s229 = scalar_lea.vmem %s4, %s228
      %p230 = pneg %p131
      %p231 = pneg %p128
      %p232 = pneg %p157
      %p233 = pneg %p154
      %p234 = scmp.lt.s32.totalorder %s16, 1
      %s235 = scalar_select %p234, %s16, 1
      %s236 = smul.addr %s235, 8
      %s237 = scalar_lea.vmem %s5, %s236
      %p238 = scmp.lt.s32.totalorder %s16, 1
      %s239 = scalar_select %p238, %s16, 1
      %s240 = smul.addr %s239, 3
      %s241 = smul.addr %s240, 4
      %s242 = scalar_lea.vmem %s0, %s241
      %p243 = scmp.lt.s32.totalorder %s16, 1
      %s244 = scalar_select %p243, %s16, 1
      %s245 = scalar_lea.vmem %s2, %s244
      %p246 = scmp.lt.s32.totalorder %s16, 1
      %s247 = scalar_select %p246, %s16, 1
      %s248 = smul.addr %s247, 8
      %s249 = scalar_lea.vmem %s4, %s248
      %p250 = scmp.lt.s32.totalorder %s16, 1
      %s251 = scalar_select %p250, %s16, 1
      %s252 = smul.addr %s251, 8
      %s253 = scalar_lea.vmem %s5, %s252
      %v255 = vld [vmem:[%s242] sm:$0xff]
      %v256 = vld [vmem:[%s242 + $0x8] sm:$0xf]
      %v257 = vld [vmem:[%s245] sm:$0x1]
      %v258 = vld [vmem:[%s1] sm:$0xff]
      %v260 = vunpack.c.h.b16 %v255
      %v261 = vpack.c.b16 %v260, %v260
      %vm262 = vcmask 261120
      %v264 = vsel %vm262, %v255, 0
      %v267 = vsel %vm262, %v261, 0
      %269 = vmatprep.subr.bf16.mxu0 0
      %270 = vmatpush1.bf16.xpose.msra.mxu0 0
      %271 = vmatprep.subr.bf16.mxu0 0
      %272 = vmatpush1.bf16.xpose.msra.mxu0 0
      %273 = vmatprep.subr.bf16.mxu0 0
      %274 = vmatpush1.bf16.xpose.msra.mxu0 0
      %275 = vmatprep.subr.bf16.mxu0 0
      %276 = vmatpush1.bf16.xpose.msra.mxu0 0
      %277 = vmatprep.subr.bf16.mxu0 0
      %278 = vmatpush1.bf16.xpose.msra.mxu0 0
      %279 = vmatprep.subr.bf16.mxu0 0
      %280 = vmatpush1.bf16.xpose.msra.mxu0 0
      %281 = vmatprep.subr.bf16.mxu0 0
      %282 = vmatpush1.bf16.xpose.msra.mxu0 0
      %283 = vmatprep.subr.bf16.mxu0 0
      %284 = vmatpush1.bf16.xpose.msra.mxu0 %v267
      %285 = vmatprep.subr.bf16.mxu0 0
      %286 = vmatpush2.bf16.xpose.msra.mxu0 0
      %287 = vmatprep.subr.bf16.mxu0 0
      %288 = vmatpush2.bf16.xpose.msra.mxu0 0
      %289 = vmatprep.subr.bf16.mxu0 0
      %290 = vmatpush2.bf16.xpose.msra.mxu0 0
      %291 = vmatprep.subr.bf16.mxu0 0
      %292 = vmatpush2.bf16.xpose.msra.mxu0 0
      %293 = vmatprep.subr.bf16.mxu0 0
      %294 = vmatpush2.bf16.xpose.msra.mxu0 0
      %295 = vmatprep.subr.bf16.mxu0 0
      %296 = vmatpush2.bf16.xpose.msra.mxu0 0
      %297 = vmatprep.subr.bf16.mxu0 0
      %298 = vmatpush2.bf16.xpose.msra.mxu0 0
      %299 = vmatprep.subr.bf16.mxu0 0
      %300 = vmatpush2.bf16.xpose.msra.mxu0 0
      %301 = vmatprep.mubr.bf16.mxu0 0
      %302 = vmatmul.mubr.bf16.gmra.mxu0 %v264
      %v303 = vpop.f32.mrf.mxu0
      %v304 = vadd.f32 %v258, %v303
      %v305 = vpop.f32.mrf.mxu0
      %v306 = vpop.f32.mrf.mxu0
      %v307 = vpop.f32.mrf.mxu0
      %308 = vdwg.mxu0
      %v310 = vlaneseq
      %v311 = vshrl.u32 %v310, 7
      %v312 = vsub.s32 0, %v311
      %v313 = vrot.slane %v257, %v312
      %v315 = vadd.f32 %v304, %v313
      %vm316 = vcmask 64512
      %v317 = vsel %vm316, %v315, -inf
      %318 = vmax.xlane.f32.xlu0 %v317
      %v319 = vpop.xlane.xlu0 %318
      %v320 = vsub.f32 %v315, %v319
      %v321 = vmul.f32 %v320, 1.442695
      %v322 = vpow.pop %v321
      %v323 = vsel %vm316, %v322, 0.0
      %324 = vadd.xlane.f32.xlu0 %v323
      %v325 = vpop.xlane.xlu0 %324
      %v326 = vpack.c.bf16 %v322, %v322
      %v328 = vsel %vm316, %v326, 0
      %vm330 = vcmask 1043456
      %v332 = vsel %vm330, %v256, 0
      %334 = vmatprep.subr.bf16.mxu0 0
      %335 = vmatpush1.bf16.msra.mxu0 0
      %336 = vmatprep.subr.bf16.mxu0 0
      %337 = vmatpush1.bf16.msra.mxu0 0
      %338 = vmatprep.subr.bf16.mxu0 0
      %339 = vmatpush1.bf16.msra.mxu0 0
      %340 = vmatprep.subr.bf16.mxu0 0
      %341 = vmatpush1.bf16.msra.mxu0 0
      %342 = vmatprep.subr.bf16.mxu0 0
      %343 = vmatpush1.bf16.msra.mxu0 0
      %344 = vmatprep.subr.bf16.mxu0 0
      %345 = vmatpush1.bf16.msra.mxu0 0
      %346 = vmatprep.subr.bf16.mxu0 0
      %347 = vmatpush1.bf16.msra.mxu0 0
      %348 = vmatprep.subr.bf16.mxu0 0
      %349 = vmatpush1.bf16.msra.mxu0 %v332
      %350 = vmatprep.subr.bf16.mxu0 0
      %351 = vmatpush2.bf16.msra.mxu0 0
      %352 = vmatprep.subr.bf16.mxu0 0
      %353 = vmatpush2.bf16.msra.mxu0 0
      %354 = vmatprep.subr.bf16.mxu0 0
      %355 = vmatpush2.bf16.msra.mxu0 0
      %356 = vmatprep.subr.bf16.mxu0 0
      %357 = vmatpush2.bf16.msra.mxu0 0
      %358 = vmatprep.subr.bf16.mxu0 0
      %359 = vmatpush2.bf16.msra.mxu0 0
      %360 = vmatprep.subr.bf16.mxu0 0
      %361 = vmatpush2.bf16.msra.mxu0 0
      %362 = vmatprep.subr.bf16.mxu0 0
      %363 = vmatpush2.bf16.msra.mxu0 0
      %364 = vmatprep.subr.bf16.mxu0 0
      %365 = vmatpush2.bf16.msra.mxu0 0
      %366 = vmatprep.mubr.bf16.mxu0 0
      %367 = vmatmul.mubr.bf16.gmra.mxu0 %v328
      %v368 = vpop.f32.mrf.mxu0
      %v369 = vadd.f32 0.0, %v368
      %v370 = vpop.f32.mrf.mxu0
      %v371 = vpop.f32.mrf.mxu0
      %v372 = vpop.f32.mrf.mxu0
      %373 = vdwg.mxu0
      %v374 = vrcp.pop %v325
      %v375 = vmul.f32 %v369, %v374
      %s376 = scalar_lea.vmem %s1, 8
      %v377 = vld [vmem:[%s376] sm:$0xff]
      %v378 = vunpack.c.l.b16 %v255
      %v379 = vpack.c.b16 %v378, %v378
      %380 = vrot.lane.b32.xlu0 %v379, 96
      %v381 = vpop.permute.xlu0 %380
      %382 = vrot.lane.b32.xlu0 %v261, 96
      %v383 = vpop.permute.xlu0 %382
      %v385 = vsel %vm262, %v381, 0
      %v388 = vsel %vm262, %v383, 0
      %390 = vmatprep.subr.bf16.mxu0 0
      %391 = vmatpush1.bf16.xpose.msra.mxu0 0
      %392 = vmatprep.subr.bf16.mxu0 0
      %393 = vmatpush1.bf16.xpose.msra.mxu0 0
      %394 = vmatprep.subr.bf16.mxu0 0
      %395 = vmatpush1.bf16.xpose.msra.mxu0 0
      %396 = vmatprep.subr.bf16.mxu0 0
      %397 = vmatpush1.bf16.xpose.msra.mxu0 0
      %398 = vmatprep.subr.bf16.mxu0 0
      %399 = vmatpush1.bf16.xpose.msra.mxu0 0
      %400 = vmatprep.subr.bf16.mxu0 0
      %401 = vmatpush1.bf16.xpose.msra.mxu0 0
      %402 = vmatprep.subr.bf16.mxu0 0
      %403 = vmatpush1.bf16.xpose.msra.mxu0 0
      %404 = vmatprep.subr.bf16.mxu0 0
      %405 = vmatpush1.bf16.xpose.msra.mxu0 %v388
      %406 = vmatprep.subr.bf16.mxu0 0
      %407 = vmatpush2.bf16.xpose.msra.mxu0 0
      %408 = vmatprep.subr.bf16.mxu0 0
      %409 = vmatpush2.bf16.xpose.msra.mxu0 0
      %410 = vmatprep.subr.bf16.mxu0 0
      %411 = vmatpush2.bf16.xpose.msra.mxu0 0
      %412 = vmatprep.subr.bf16.mxu0 0
      %413 = vmatpush2.bf16.xpose.msra.mxu0 0
      %414 = vmatprep.subr.bf16.mxu0 0
      %415 = vmatpush2.bf16.xpose.msra.mxu0 0
      %416 = vmatprep.subr.bf16.mxu0 0
      %417 = vmatpush2.bf16.xpose.msra.mxu0 0
      %418 = vmatprep.subr.bf16.mxu0 0
      %419 = vmatpush2.bf16.xpose.msra.mxu0 0
      %420 = vmatprep.subr.bf16.mxu0 0
      %421 = vmatpush2.bf16.xpose.msra.mxu0 0
      %422 = vmatprep.mubr.bf16.mxu0 0
      %423 = vmatmul.mubr.bf16.gmra.mxu0 %v385
      %v424 = vpop.f32.mrf.mxu0
      %v425 = vadd.f32 %v377, %v424
      %v426 = vpop.f32.mrf.mxu0
      %v427 = vpop.f32.mrf.mxu0
      %v428 = vpop.f32.mrf.mxu0
      %429 = vdwg.mxu0
      %v430 = vadd.f32 %v425, %v313
      %v431 = vsel %vm316, %v430, -inf
      %432 = vmax.xlane.f32.xlu0 %v431
      %v433 = vpop.xlane.xlu0 %432
      %v434 = vsub.f32 %v430, %v433
      %v435 = vmul.f32 %v434, 1.442695
      %v436 = vpow.pop %v435
      %v437 = vsel %vm316, %v436, 0.0
      %438 = vadd.xlane.f32.xlu0 %v437
      %v439 = vpop.xlane.xlu0 %438
      %v440 = vpack.c.bf16 %v436, %v436
      %v442 = vunpack.c.l.b16 %v256
      %v443 = vpack.c.b16 %v442, %v442
      %444 = vrot.lane.b32.xlu0 %v443, 96
      %v445 = vpop.permute.xlu0 %444
      %v447 = vsel %vm316, %v440, 0
      %v450 = vsel %vm330, %v445, 0
      %452 = vmatprep.subr.bf16.mxu0 0
      %453 = vmatpush1.bf16.msra.mxu0 0
      %454 = vmatprep.subr.bf16.mxu0 0
      %455 = vmatpush1.bf16.msra.mxu0 0
      %456 = vmatprep.subr.bf16.mxu0 0
      %457 = vmatpush1.bf16.msra.mxu0 0
      %458 = vmatprep.subr.bf16.mxu0 0
      %459 = vmatpush1.bf16.msra.mxu0 0
      %460 = vmatprep.subr.bf16.mxu0 0
      %461 = vmatpush1.bf16.msra.mxu0 0
      %462 = vmatprep.subr.bf16.mxu0 0
      %463 = vmatpush1.bf16.msra.mxu0 0
      %464 = vmatprep.subr.bf16.mxu0 0
      %465 = vmatpush1.bf16.msra.mxu0 0
      %466 = vmatprep.subr.bf16.mxu0 0
      %467 = vmatpush1.bf16.msra.mxu0 %v450
      %468 = vmatprep.subr.bf16.mxu0 0
      %469 = vmatpush2.bf16.msra.mxu0 0
      %470 = vmatprep.subr.bf16.mxu0 0
      %471 = vmatpush2.bf16.msra.mxu0 0
      %472 = vmatprep.subr.bf16.mxu0 0
      %473 = vmatpush2.bf16.msra.mxu0 0
      %474 = vmatprep.subr.bf16.mxu0 0
      %475 = vmatpush2.bf16.msra.mxu0 0
      %476 = vmatprep.subr.bf16.mxu0 0
      %477 = vmatpush2.bf16.msra.mxu0 0
      %478 = vmatprep.subr.bf16.mxu0 0
      %479 = vmatpush2.bf16.msra.mxu0 0
      %480 = vmatprep.subr.bf16.mxu0 0
      %481 = vmatpush2.bf16.msra.mxu0 0
      %482 = vmatprep.subr.bf16.mxu0 0
      %483 = vmatpush2.bf16.msra.mxu0 0
      %484 = vmatprep.mubr.bf16.mxu0 0
      %485 = vmatmul.mubr.bf16.gmra.mxu0 %v447
      %v486 = vpop.f32.mrf.mxu0
      %v487 = vadd.f32 0.0, %v486
      %v488 = vpop.f32.mrf.mxu0
      %v489 = vpop.f32.mrf.mxu0
      %v490 = vpop.f32.mrf.mxu0
      %491 = vdwg.mxu0
      %v492 = vrcp.pop %v439
      %v493 = vmul.f32 %v487, %v492
      %s494 = scalar_lea.vmem %s1, 16
      %v495 = vld [vmem:[%s494] sm:$0xff]
      %496 = vrot.lane.b32.xlu0 %v379, 64
      %v497 = vpop.permute.xlu0 %496
      %498 = vrot.lane.b32.xlu0 %v261, 64
      %v499 = vpop.permute.xlu0 %498
      %v501 = vsel %vm262, %v497, 0
      %v504 = vsel %vm262, %v499, 0
      %506 = vmatprep.subr.bf16.mxu0 0
      %507 = vmatpush1.bf16.xpose.msra.mxu0 0
      %508 = vmatprep.subr.bf16.mxu0 0
      %509 = vmatpush1.bf16.xpose.msra.mxu0 0
      %510 = vmatprep.subr.bf16.mxu0 0
      %511 = vmatpush1.bf16.xpose.msra.mxu0 0
      %512 = vmatprep.subr.bf16.mxu0 0
      %513 = vmatpush1.bf16.xpose.msra.mxu0 0
      %514 = vmatprep.subr.bf16.mxu0 0
      %515 = vmatpush1.bf16.xpose.msra.mxu0 0
      %516 = vmatprep.subr.bf16.mxu0 0
      %517 = vmatpush1.bf16.xpose.msra.mxu0 0
      %518 = vmatprep.subr.bf16.mxu0 0
      %519 = vmatpush1.bf16.xpose.msra.mxu0 0
      %520 = vmatprep.subr.bf16.mxu0 0
      %521 = vmatpush1.bf16.xpose.msra.mxu0 %v504
      %522 = vmatprep.subr.bf16.mxu0 0
      %523 = vmatpush2.bf16.xpose.msra.mxu0 0
      %524 = vmatprep.subr.bf16.mxu0 0
      %525 = vmatpush2.bf16.xpose.msra.mxu0 0
      %526 = vmatprep.subr.bf16.mxu0 0
      %527 = vmatpush2.bf16.xpose.msra.mxu0 0
      %528 = vmatprep.subr.bf16.mxu0 0
      %529 = vmatpush2.bf16.xpose.msra.mxu0 0
      %530 = vmatprep.subr.bf16.mxu0 0
      %531 = vmatpush2.bf16.xpose.msra.mxu0 0
      %532 = vmatprep.subr.bf16.mxu0 0
      %533 = vmatpush2.bf16.xpose.msra.mxu0 0
      %534 = vmatprep.subr.bf16.mxu0 0
      %535 = vmatpush2.bf16.xpose.msra.mxu0 0
      %536 = vmatprep.subr.bf16.mxu0 0
      %537 = vmatpush2.bf16.xpose.msra.mxu0 0
      %538 = vmatprep.mubr.bf16.mxu0 0
      %539 = vmatmul.mubr.bf16.gmra.mxu0 %v501
      %v540 = vpop.f32.mrf.mxu0
      %v541 = vadd.f32 %v495, %v540
      %v542 = vpop.f32.mrf.mxu0
      %v543 = vpop.f32.mrf.mxu0
      %v544 = vpop.f32.mrf.mxu0
      %545 = vdwg.mxu0
      %v546 = vadd.f32 %v541, %v313
      %v547 = vsel %vm316, %v546, -inf
      %548 = vmax.xlane.f32.xlu0 %v547
      %v549 = vpop.xlane.xlu0 %548
      %v550 = vsub.f32 %v546, %v549
      %v551 = vmul.f32 %v550, 1.442695
      %v552 = vpow.pop %v551
      %v553 = vsel %vm316, %v552, 0.0
      %554 = vadd.xlane.f32.xlu0 %v553
      %v555 = vpop.xlane.xlu0 %554
      %v556 = vpack.c.bf16 %v552, %v552
      %557 = vrot.lane.b32.xlu0 %v443, 64
      %v558 = vpop.permute.xlu0 %557
      %v560 = vsel %vm316, %v556, 0
      %v563 = vsel %vm330, %v558, 0
      %565 = vmatprep.subr.bf16.mxu0 0
      %566 = vmatpush1.bf16.msra.mxu0 0
      %567 = vmatprep.subr.bf16.mxu0 0
      %568 = vmatpush1.bf16.msra.mxu0 0
      %569 = vmatprep.subr.bf16.mxu0 0
      %570 = vmatpush1.bf16.msra.mxu0 0
      %571 = vmatprep.subr.bf16.mxu0 0
      %572 = vmatpush1.bf16.msra.mxu0 0
      %573 = vmatprep.subr.bf16.mxu0 0
      %574 = vmatpush1.bf16.msra.mxu0 0
      %575 = vmatprep.subr.bf16.mxu0 0
      %576 = vmatpush1.bf16.msra.mxu0 0
      %577 = vmatprep.subr.bf16.mxu0 0
      %578 = vmatpush1.bf16.msra.mxu0 0
      %579 = vmatprep.subr.bf16.mxu0 0
      %580 = vmatpush1.bf16.msra.mxu0 %v563
      %581 = vmatprep.subr.bf16.mxu0 0
      %582 = vmatpush2.bf16.msra.mxu0 0
      %583 = vmatprep.subr.bf16.mxu0 0
      %584 = vmatpush2.bf16.msra.mxu0 0
      %585 = vmatprep.subr.bf16.mxu0 0
      %586 = vmatpush2.bf16.msra.mxu0 0
      %587 = vmatprep.subr.bf16.mxu0 0
      %588 = vmatpush2.bf16.msra.mxu0 0
      %589 = vmatprep.subr.bf16.mxu0 0
      %590 = vmatpush2.bf16.msra.mxu0 0
      %591 = vmatprep.subr.bf16.mxu0 0
      %592 = vmatpush2.bf16.msra.mxu0 0
      %593 = vmatprep.subr.bf16.mxu0 0
      %594 = vmatpush2.bf16.msra.mxu0 0
      %595 = vmatprep.subr.bf16.mxu0 0
      %596 = vmatpush2.bf16.msra.mxu0 0
      %597 = vmatprep.mubr.bf16.mxu0 0
      %598 = vmatmul.mubr.bf16.gmra.mxu0 %v560
      %v599 = vpop.f32.mrf.mxu0
      %v600 = vadd.f32 0.0, %v599
      %v601 = vpop.f32.mrf.mxu0
      %v602 = vpop.f32.mrf.mxu0
      %v603 = vpop.f32.mrf.mxu0
      %604 = vdwg.mxu0
      %v605 = vrcp.pop %v555
      %v606 = vmul.f32 %v600, %v605
      %s607 = scalar_lea.vmem %s1, 24
      %v608 = vld [vmem:[%s607] sm:$0xff]
      %609 = vrot.lane.b32.xlu0 %v379, 32
      %v610 = vpop.permute.xlu0 %609
      %611 = vrot.lane.b32.xlu0 %v261, 32
      %v612 = vpop.permute.xlu0 %611
      %v614 = vsel %vm262, %v610, 0
      %v617 = vsel %vm262, %v612, 0
      %619 = vmatprep.subr.bf16.mxu0 0
      %620 = vmatpush1.bf16.xpose.msra.mxu0 0
      %621 = vmatprep.subr.bf16.mxu0 0
      %622 = vmatpush1.bf16.xpose.msra.mxu0 0
      %623 = vmatprep.subr.bf16.mxu0 0
      %624 = vmatpush1.bf16.xpose.msra.mxu0 0
      %625 = vmatprep.subr.bf16.mxu0 0
      %626 = vmatpush1.bf16.xpose.msra.mxu0 0
      %627 = vmatprep.subr.bf16.mxu0 0
      %628 = vmatpush1.bf16.xpose.msra.mxu0 0
      %629 = vmatprep.subr.bf16.mxu0 0
      %630 = vmatpush1.bf16.xpose.msra.mxu0 0
      %631 = vmatprep.subr.bf16.mxu0 0
      %632 = vmatpush1.bf16.xpose.msra.mxu0 0
      %633 = vmatprep.subr.bf16.mxu0 0
      %634 = vmatpush1.bf16.xpose.msra.mxu0 %v617
      %635 = vmatprep.subr.bf16.mxu0 0
      %636 = vmatpush2.bf16.xpose.msra.mxu0 0
      %637 = vmatprep.subr.bf16.mxu0 0
      %638 = vmatpush2.bf16.xpose.msra.mxu0 0
      %639 = vmatprep.subr.bf16.mxu0 0
      %640 = vmatpush2.bf16.xpose.msra.mxu0 0
      %641 = vmatprep.subr.bf16.mxu0 0
      %642 = vmatpush2.bf16.xpose.msra.mxu0 0
      %643 = vmatprep.subr.bf16.mxu0 0
      %644 = vmatpush2.bf16.xpose.msra.mxu0 0
      %645 = vmatprep.subr.bf16.mxu0 0
      %646 = vmatpush2.bf16.xpose.msra.mxu0 0
      %647 = vmatprep.subr.bf16.mxu0 0
      %648 = vmatpush2.bf16.xpose.msra.mxu0 0
      %649 = vmatprep.subr.bf16.mxu0 0
      %650 = vmatpush2.bf16.xpose.msra.mxu0 0
      %651 = vmatprep.mubr.bf16.mxu0 0
      %652 = vmatmul.mubr.bf16.gmra.mxu0 %v614
      %v653 = vpop.f32.mrf.mxu0
      %v654 = vadd.f32 %v608, %v653
      %v655 = vpop.f32.mrf.mxu0
      %v656 = vpop.f32.mrf.mxu0
      %v657 = vpop.f32.mrf.mxu0
      %658 = vdwg.mxu0
      %v659 = vadd.f32 %v654, %v313
      %v660 = vsel %vm316, %v659, -inf
      %661 = vmax.xlane.f32.xlu0 %v660
      %v662 = vpop.xlane.xlu0 %661
      %v663 = vsub.f32 %v659, %v662
      %v664 = vmul.f32 %v663, 1.442695
      %v665 = vpow.pop %v664
      %v666 = vsel %vm316, %v665, 0.0
      %667 = vadd.xlane.f32.xlu0 %v666
      %v668 = vpop.xlane.xlu0 %667
      %v669 = vpack.c.bf16 %v665, %v665
      %670 = vrot.lane.b32.xlu0 %v443, 32
      %v671 = vpop.permute.xlu0 %670
      %v673 = vsel %vm316, %v669, 0
      %v676 = vsel %vm330, %v671, 0
      %678 = vmatprep.subr.bf16.mxu0 0
      %679 = vmatpush1.bf16.msra.mxu0 0
      %680 = vmatprep.subr.bf16.mxu0 0
      %681 = vmatpush1.bf16.msra.mxu0 0
      %682 = vmatprep.subr.bf16.mxu0 0
      %683 = vmatpush1.bf16.msra.mxu0 0
      %684 = vmatprep.subr.bf16.mxu0 0
      %685 = vmatpush1.bf16.msra.mxu0 0
      %686 = vmatprep.subr.bf16.mxu0 0
      %687 = vmatpush1.bf16.msra.mxu0 0
      %688 = vmatprep.subr.bf16.mxu0 0
      %689 = vmatpush1.bf16.msra.mxu0 0
      %690 = vmatprep.subr.bf16.mxu0 0
      %691 = vmatpush1.bf16.msra.mxu0 0
      %692 = vmatprep.subr.bf16.mxu0 0
      %693 = vmatpush1.bf16.msra.mxu0 %v676
      %694 = vmatprep.subr.bf16.mxu0 0
      %695 = vmatpush2.bf16.msra.mxu0 0
      %696 = vmatprep.subr.bf16.mxu0 0
      %697 = vmatpush2.bf16.msra.mxu0 0
      %698 = vmatprep.subr.bf16.mxu0 0
      %699 = vmatpush2.bf16.msra.mxu0 0
      %700 = vmatprep.subr.bf16.mxu0 0
      %701 = vmatpush2.bf16.msra.mxu0 0
      %702 = vmatprep.subr.bf16.mxu0 0
      %703 = vmatpush2.bf16.msra.mxu0 0
      %704 = vmatprep.subr.bf16.mxu0 0
      %705 = vmatpush2.bf16.msra.mxu0 0
      %706 = vmatprep.subr.bf16.mxu0 0
      %707 = vmatpush2.bf16.msra.mxu0 0
      %708 = vmatprep.subr.bf16.mxu0 0
      %709 = vmatpush2.bf16.msra.mxu0 0
      %710 = vmatprep.mubr.bf16.mxu0 0
      %711 = vmatmul.mubr.bf16.gmra.mxu0 %v673
      %v712 = vpop.f32.mrf.mxu0
      %v713 = vadd.f32 0.0, %v712
      %v714 = vpop.f32.mrf.mxu0
      %v715 = vpop.f32.mrf.mxu0
      %v716 = vpop.f32.mrf.mxu0
      %717 = vdwg.mxu0
      %v718 = vrcp.pop %v668
      %v719 = vmul.f32 %v713, %v718
      %721 = vrot.lane.b32.xlu0 %v493, 32
      %v722 = vpop.permute.xlu0 %721
      %725 = vrot.lane.b32.xlu0 %v606, 64
      %v726 = vpop.permute.xlu0 %725
      %729 = vrot.lane.b32.xlu0 %v719, 96
      %v730 = vpop.permute.xlu0 %729
      %v732 = vsel %vm262, %v375, %v722
      %vm733 = vcmask 523264
      %v734 = vsel %vm733, %v732, %v726
      %vm735 = vcmask 785408
      %v736 = vsel %vm735, %v734, %v730
      %v737 = vpack.c.bf16 %v736, %v736
      %v738 = vld [vmem:[%s249] sm:$0xff]
      %v739 = vld [vmem:[%s3] sm:$0xf]
      %v740 = vld [vmem:[%s3 + $0x4] sm:$0xf]
      %v741 = vld [vmem:[%s3 + $0x8] sm:$0xf]
      %v742 = vld [vmem:[%s3 + $0xc] sm:$0xf]
      %v743 = vld [vmem:[%s3 + $0x10] sm:$0xf]
      %v744 = vld [vmem:[%s3 + $0x14] sm:$0xf]
      %v745 = vld [vmem:[%s3 + $0x18] sm:$0xf]
      %v746 = vld [vmem:[%s3 + $0x1c] sm:$0xf]
      %v747 = vld [vmem:[%s3 + $0x20] sm:$0xf]
      %v748 = vld [vmem:[%s3 + $0x24] sm:$0xf]
      %v749 = vld [vmem:[%s3 + $0x28] sm:$0xf]
      %v750 = vld [vmem:[%s3 + $0x2c] sm:$0xf]
      %v751 = vld [vmem:[%s3 + $0x30] sm:$0xf]
      %v752 = vld [vmem:[%s3 + $0x34] sm:$0xf]
      %v753 = vld [vmem:[%s3 + $0x38] sm:$0xf]
      %v754 = vld [vmem:[%s3 + $0x3c] sm:$0xf]
      %v771 = vunpack.c.l.b16 %v739
      %v772 = vunpack.c.l.b16 %v740
      %v773 = vunpack.c.l.b16 %v741
      %v774 = vunpack.c.l.b16 %v742
      %v775 = vunpack.c.l.b16 %v743
      %v776 = vunpack.c.l.b16 %v744
      %v777 = vunpack.c.l.b16 %v745
      %v778 = vunpack.c.l.b16 %v746
      %v779 = vunpack.c.l.b16 %v747
      %v780 = vunpack.c.l.b16 %v748
      %v781 = vunpack.c.l.b16 %v749
      %v782 = vunpack.c.l.b16 %v750
      %v783 = vunpack.c.l.b16 %v751
      %v784 = vunpack.c.l.b16 %v752
      %v785 = vunpack.c.l.b16 %v753
      %v786 = vunpack.c.l.b16 %v754
      %v787 = vpack.c.b16 %v772, %v771
      %v788 = vpack.c.b16 %v774, %v773
      %v789 = vpack.c.b16 %v776, %v775
      %v790 = vpack.c.b16 %v778, %v777
      %v791 = vpack.c.b16 %v780, %v779
      %v792 = vpack.c.b16 %v782, %v781
      %v793 = vpack.c.b16 %v784, %v783
      %v794 = vpack.c.b16 %v786, %v785
      %803 = vmatprep.subr.bf16.mxu0 0
      %804 = vmatpush1.bf16.msra.mxu0 %v794
      %805 = vmatprep.subr.bf16.mxu0 0
      %806 = vmatpush1.bf16.msra.mxu0 %v793
      %807 = vmatprep.subr.bf16.mxu0 0
      %808 = vmatpush1.bf16.msra.mxu0 %v792
      %809 = vmatprep.subr.bf16.mxu0 0
      %810 = vmatpush1.bf16.msra.mxu0 %v791
      %811 = vmatprep.subr.bf16.mxu0 0
      %812 = vmatpush1.bf16.msra.mxu0 %v790
      %813 = vmatprep.subr.bf16.mxu0 0
      %814 = vmatpush1.bf16.msra.mxu0 %v789
      %815 = vmatprep.subr.bf16.mxu0 0
      %816 = vmatpush1.bf16.msra.mxu0 %v788
      %817 = vmatprep.subr.bf16.mxu0 0
      %818 = vmatpush1.bf16.msra.mxu0 %v787
      %819 = vmatprep.subr.bf16.mxu0 0
      %820 = vmatpush2.bf16.msra.mxu0 0
      %821 = vmatprep.subr.bf16.mxu0 0
      %822 = vmatpush2.bf16.msra.mxu0 0
      %823 = vmatprep.subr.bf16.mxu0 0
      %824 = vmatpush2.bf16.msra.mxu0 0
      %825 = vmatprep.subr.bf16.mxu0 0
      %826 = vmatpush2.bf16.msra.mxu0 0
      %827 = vmatprep.subr.bf16.mxu0 0
      %828 = vmatpush2.bf16.msra.mxu0 0
      %829 = vmatprep.subr.bf16.mxu0 0
      %830 = vmatpush2.bf16.msra.mxu0 0
      %831 = vmatprep.subr.bf16.mxu0 0
      %832 = vmatpush2.bf16.msra.mxu0 0
      %833 = vmatprep.subr.bf16.mxu0 0
      %834 = vmatpush2.bf16.msra.mxu0 0
      %835 = vmatprep.mubr.bf16.mxu0 0
      %836 = vmatmul.mubr.bf16.gmra.mxu0 %v737
      %v837 = vpop.f32.mrf.mxu0
      %v838 = vadd.f32 0.0, %v837
      %v839 = vpop.f32.mrf.mxu0
      %v840 = vpop.f32.mrf.mxu0
      %v841 = vpop.f32.mrf.mxu0
      %842 = vdwg.mxu0
      %v843 = vadd.f32 %v738, %v838
      %844 = vst [vmem:[%s253] sm:$0xff] %v843
      %p845 = scmp.lt.s32.totalorder %s16, 1
      %s846 = scalar_select %p845, %s16, 1
      %s847 = smul.addr %s846, 8
      %s848 = scalar_lea.vmem %s5, %s847
      // Predicated region
      $region41: #{t5_encoder_forward.8} parent=39 // pred_check
        %p849 = pneg %p154
      $region42: #{t5_encoder_forward.8} parent=39 // pred_check_branch
        %851 = sbr.rel (%p849) target = $region44
      $region43: #{t5_encoder_forward.8} parent=39 // pred_region
        _
      $region44: #{t5_encoder_forward.8} parent=39 // pred_fallthru
        _
    $region40: #{t5_encoder_forward.8} parent=5 // pred_fallthru
      _
    %p852 = scmp.le.s32.totalorder 2, %s11
    // Predicated region
    $region45: #{t5_encoder_forward.8} parent=5 // pred_check
      %p853 = pneg %p852
    $region46: #{t5_encoder_forward.8} parent=5 // pred_check_branch
      %855 = sbr.rel (%p853) target = $region48
    $region47: #{t5_encoder_forward.8} parent=5 // pred_region
      %s856 = ssub.s32 %s11, 2
      // Predicated region
      $region49: #{t5_encoder_forward.8} parent=47 // pred_check
        %p857 = pneg %p160
      $region50: #{t5_encoder_forward.8} parent=47 // pred_check_branch
        %859 = sbr.rel (%p857) target = $region52
      $region51: #{t5_encoder_forward.8} parent=47 // pred_region
        %p860 = scmp.lt.s32.totalorder %s17, 1
        %s861 = scalar_select %p860, %s17, 1
        %s862 = smul.addr %s861, 8
        %s863 = scalar_lea.vmem %s5, %s862
      $region52: #{t5_encoder_forward.8} parent=47 // pred_fallthru
        _
    $region48: #{t5_encoder_forward.8} parent=5 // pred_fallthru
      _
  $region6: #{t5_encoder_forward.8} parent=0 // loop_footer
    %s15 = sadd.s32 1, %s11
  $region7: #{t5_encoder_forward.8} parent=0 // loop_footer_branch
    %10 = sbr.rel target = $region3
  $region8: #{t5_encoder_forward.8} parent=0 // loop_exit
    _

// kernel: t5_encoder_forward.9
$region0: #{t5_encoder_forward.9}
  #allocation0 [shape = 'u32[]', space=smem, size = 0x4, offset = 0x4, fixed_abs, tag = 'smem constant byte address 0x4 - core index']
  #allocation1 [shape = 'u32[144,128]{1,0:T(1,128)}', space=vmem, size = 0x12000, scoped, tag = 'internal scratch']
  %s0 = inlined_call_operand.vmem [shape: f32[16,128], index: 0, kind: input, shape index: {}]
  %s1 = inlined_call_operand.vmem [shape: f32[1,128], index: 1, kind: input, shape index: {}]
  %s2 = inlined_call_operand.vmem [shape: bf16[128,512], index: 2, kind: input, shape index: {}]
  %s3 = inlined_call_operand.vmem [shape: bf16[256,128], index: 3, kind: input, shape index: {}]
  %s4 = inlined_call_operand.vmem [shape: f32[16,128], index: 4, kind: output, shape index: {}]
  %s5 = sld [smem:[#allocation0]]
  $region26: #{t5_encoder_forward.9} parent=0
    _
  %s7 = ssub.s32 1, %s5
  %s8 = scalar_select 0, %s7, %s5
  // Predicated region
  $region2: #{t5_encoder_forward.9} parent=0 // pred_check
    _
  $region3: #{t5_encoder_forward.9} parent=0 // pred_check_branch
    %10 = sbr.rel (0) target = $region5
  $region4: #{t5_encoder_forward.9} parent=0 // pred_region
    _
  $region5: #{t5_encoder_forward.9} parent=0 // pred_fallthru
    _
  // Predicated region
  $region6: #{t5_encoder_forward.9} parent=0 // pred_check
    _
  $region7: #{t5_encoder_forward.9} parent=0 // pred_check_branch
    %12 = sbr.rel (0) target = $region9
  $region8: #{t5_encoder_forward.9} parent=0 // pred_region
    _
  $region9: #{t5_encoder_forward.9} parent=0 // pred_fallthru
    _
  // Predicated region
  $region10: #{t5_encoder_forward.9} parent=0 // pred_check
    _
  $region11: #{t5_encoder_forward.9} parent=0 // pred_check_branch
    %14 = sbr.rel (0) target = $region13
  $region12: #{t5_encoder_forward.9} parent=0 // pred_region
    _
  $region13: #{t5_encoder_forward.9} parent=0 // pred_fallthru
    _
  // Predicated region
  $region14: #{t5_encoder_forward.9} parent=0 // pred_check
    _
  $region15: #{t5_encoder_forward.9} parent=0 // pred_check_branch
    %16 = sbr.rel (0) target = $region17
  $region16: #{t5_encoder_forward.9} parent=0 // pred_region
    _
  $region17: #{t5_encoder_forward.9} parent=0 // pred_fallthru
    _
  %v18 = vld [vmem:[%s0] sm:$0xff]
  %v19 = vld [vmem:[%s0 + $0x8] sm:$0xff]
  %v20 = vmul.f32 %v18, %v18
  %v21 = vmul.f32 %v19, %v19
  %22 = vadd.xlane.f32.xlu0 %v20
  %v23 = vpop.xlane.xlu0 %22
  %24 = vadd.xlane.f32.xlu0 %v21
  %v25 = vpop.xlane.xlu0 %24
  %v26 = vrcp.pop 128.0
  %v27 = vmul.f32 %v23, %v26
  %v28 = vmul.f32 %v25, %v26
  %v29 = vadd.f32 %v27, 1e-06
  %v30 = vadd.f32 %v28, 1e-06
  %v31 = vrsqrt.pop %v29
  %v32 = vrsqrt.pop %v30
  %v33 = vmul.f32 %v18, %v31
  %v34 = vmul.f32 %v19, %v32
  %v35 = vld [vmem:[%s1] sm:$0x1]
  %v37 = vlaneseq
  %v38 = vshrl.u32 %v37, 7
  %v39 = vsub.s32 0, %v38
  %v40 = vrot.slane %v35, %v39
  %v42 = vmul.f32 %v33, %v40
  %v43 = vmul.f32 %v34, %v40
  %v44 = vpack.c.bf16 %v43, %v42
  %v45 = vld [vmem:[%s2] sm:$0xff]
  %v46 = vld [vmem:[%s2 + $0x8] sm:$0xff]
  %v47 = vld [vmem:[%s2 + $0x10] sm:$0xff]
  %v48 = vld [vmem:[%s2 + $0x18] sm:$0xff]
  %v49 = vld [vmem:[%s2 + $0x20] sm:$0xff]
  %v50 = vld [vmem:[%s2 + $0x28] sm:$0xff]
  %v51 = vld [vmem:[%s2 + $0x30] sm:$0xff]
  %v52 = vld [vmem:[%s2 + $0x38] sm:$0xff]
  %v53 = vld [vmem:[%s2 + $0x40] sm:$0xff]
  %v54 = vld [vmem:[%s2 + $0x48] sm:$0xff]
  %v55 = vld [vmem:[%s2 + $0x50] sm:$0xff]
  %v56 = vld [vmem:[%s2 + $0x58] sm:$0xff]
  %v57 = vld [vmem:[%s2 + $0x60] sm:$0xff]
  %v58 = vld [vmem:[%s2 + $0x68] sm:$0xff]
  %v59 = vld [vmem:[%s2 + $0x70] sm:$0xff]
  %v60 = vld [vmem:[%s2 + $0x78] sm:$0xff]
  %v61 = vld [vmem:[%s2 + $0x80] sm:$0xff]
  %v62 = vld [vmem:[%s2 + $0x88] sm:$0xff]
  %v63 = vld [vmem:[%s2 + $0x90] sm:$0xff]
  %v64 = vld [vmem:[%s2 + $0x98] sm:$0xff]
  %v65 = vld [vmem:[%s2 + $0xa0] sm:$0xff]
  %v66 = vld [vmem:[%s2 + $0xa8] sm:$0xff]
  %v67 = vld [vmem:[%s2 + $0xb0] sm:$0xff]
  %v68 = vld [vmem:[%s2 + $0xb8] sm:$0xff]
  %v69 = vld [vmem:[%s2 + $0xc0] sm:$0xff]
  %v70 = vld [vmem:[%s2 + $0xc8] sm:$0xff]
  %v71 = vld [vmem:[%s2 + $0xd0] sm:$0xff]
  %v72 = vld [vmem:[%s2 + $0xd8] sm:$0xff]
  %v73 = vld [vmem:[%s2 + $0xe0] sm:$0xff]
  %v74 = vld [vmem:[%s2 + $0xe8] sm:$0xff]
  %v75 = vld [vmem:[%s2 + $0xf0] sm:$0xff]
  %v76 = vld [vmem:[%s2 + $0xf8] sm:$0xff]
  %v109 = vunpack.c.l.b16 %v45
  %v110 = vunpack.c.h.b16 %v45
  %v111 = vunpack.c.l.b16 %v46
  %v112 = vunpack.c.h.b16 %v46
  %v113 = vunpack.c.l.b16 %v47
  %v114 = vunpack.c.h.b16 %v47
  %v115 = vunpack.c.l.b16 %v48
  %v116 = vunpack.c.h.b16 %v48
  %v117 = vunpack.c.l.b16 %v49
  %v118 = vunpack.c.h.b16 %v49
  %v119 = vunpack.c.l.b16 %v50
  %v120 = vunpack.c.h.b16 %v50
  %v121 = vunpack.c.l.b16 %v51
  %v122 = vunpack.c.h.b16 %v51
  %v123 = vunpack.c.l.b16 %v52
  %v124 = vunpack.c.h.b16 %v52
  %v125 = vunpack.c.l.b16 %v53
  %v126 = vunpack.c.h.b16 %v53
  %v127 = vunpack.c.l.b16 %v54
  %v128 = vunpack.c.h.b16 %v54
  %v129 = vunpack.c.l.b16 %v55
  %v130 = vunpack.c.h.b16 %v55
  %v131 = vunpack.c.l.b16 %v56
  %v132 = vunpack.c.h.b16 %v56
  %v133 = vunpack.c.l.b16 %v57
  %v134 = vunpack.c.h.b16 %v57
  %v135 = vunpack.c.l.b16 %v58
  %v136 = vunpack.c.h.b16 %v58
  %v137 = vunpack.c.l.b16 %v59
  %v138 = vunpack.c.h.b16 %v59
  %v139 = vunpack.c.l.b16 %v60
  %v140 = vunpack.c.h.b16 %v60
  %v141 = vunpack.c.l.b16 %v61
  %v142 = vunpack.c.h.b16 %v61
  %v143 = vunpack.c.l.b16 %v62
  %v144 = vunpack.c.h.b16 %v62
  %v145 = vunpack.c.l.b16 %v63
  %v146 = vunpack.c.h.b16 %v63
  %v147 = vunpack.c.l.b16 %v64
  %v148 = vunpack.c.h.b16 %v64
  %v149 = vunpack.c.l.b16 %v65
  %v150 = vunpack.c.h.b16 %v65
  %v151 = vunpack.c.l.b16 %v66
  %v152 = vunpack.c.h.b16 %v66
  %v153 = vunpack.c.l.b16 %v67
  %v154 = vunpack.c.h.b16 %v67
  %v155 = vunpack.c.l.b16 %v68
  %v156 = vunpack.c.h.b16 %v68
  %v157 = vunpack.c.l.b16 %v69
  %v158 = vunpack.c.h.b16 %v69
  %v159 = vunpack.c.l.b16 %v70
  %v160 = vunpack.c.h.b16 %v70
  %v161 = vunpack.c.l.b16 %v71
  %v162 = vunpack.c.h.b16 %v71
  %v163 = vunpack.c.l.b16 %v72
  %v164 = vunpack.c.h.b16 %v72
  %v165 = vunpack.c.l.b16 %v73
  %v166 = vunpack.c.h.b16 %v73
  %v167 = vunpack.c.l.b16 %v74
  %v168 = vunpack.c.h.b16 %v74
  %v169 = vunpack.c.l.b16 %v75
  %v170 = vunpack.c.h.b16 %v75
  %v171 = vunpack.c.l.b16 %v76
  %v172 = vunpack.c.h.b16 %v76
  %v173 = vpack.c.b16 %v113, %v109
  %v174 = vpack.c.b16 %v114, %v110
  %v175 = vpack.c.b16 %v115, %v111
  %v176 = vpack.c.b16 %v116, %v112
  %v177 = vpack.c.b16 %v121, %v117
  %v178 = vpack.c.b16 %v122, %v118
  %v179 = vpack.c.b16 %v123, %v119
  %v180 = vpack.c.b16 %v124, %v120
  %v181 = vpack.c.b16 %v129, %v125
  %v182 = vpack.c.b16 %v130, %v126
  %v183 = vpack.c.b16 %v131, %v127
  %v184 = vpack.c.b16 %v132, %v128
  %v185 = vpack.c.b16 %v137, %v133
  %v186 = vpack.c.b16 %v138, %v134
  %v187 = vpack.c.b16 %v139, %v135
  %v188 = vpack.c.b16 %v140, %v136
  %v189 = vpack.c.b16 %v145, %v141
  %v190 = vpack.c.b16 %v146, %v142
  %v191 = vpack.c.b16 %v147, %v143
  %v192 = vpack.c.b16 %v148, %v144
  %v193 = vpack.c.b16 %v153, %v149
  %v194 = vpack.c.b16 %v154, %v150
  %v195 = vpack.c.b16 %v155, %v151
  %v196 = vpack.c.b16 %v156, %v152
  %v197 = vpack.c.b16 %v161, %v157
  %v198 = vpack.c.b16 %v162, %v158
  %v199 = vpack.c.b16 %v163, %v159
  %v200 = vpack.c.b16 %v164, %v160
  %v201 = vpack.c.b16 %v169, %v165
  %v202 = vpack.c.b16 %v170, %v166
  %v203 = vpack.c.b16 %v171, %v167
  %v204 = vpack.c.b16 %v172, %v168
  %237 = vmatprep.subr.bf16.mxu0 %v202
  %238 = vmatpush1.bf16.msra.mxu0 %v201
  %239 = vmatprep.subr.bf16.mxu0 %v198
  %240 = vmatpush1.bf16.msra.mxu0 %v197
  %241 = vmatprep.subr.bf16.mxu0 %v194
  %242 = vmatpush1.bf16.msra.mxu0 %v193
  %243 = vmatprep.subr.bf16.mxu0 %v190
  %244 = vmatpush1.bf16.msra.mxu0 %v189
  %245 = vmatprep.subr.bf16.mxu0 %v186
  %246 = vmatpush1.bf16.msra.mxu0 %v185
  %247 = vmatprep.subr.bf16.mxu0 %v182
  %248 = vmatpush1.bf16.msra.mxu0 %v181
  %249 = vmatprep.subr.bf16.mxu0 %v178
  %250 = vmatpush1.bf16.msra.mxu0 %v177
  %251 = vmatprep.subr.bf16.mxu0 %v174
  %252 = vmatpush1.bf16.msra.mxu0 %v173
  %253 = vmatprep.subr.bf16.mxu0 0
  %254 = vmatpush2.bf16.msra.mxu0 0
  %255 = vmatprep.subr.bf16.mxu0 0
  %256 = vmatpush2.bf16.msra.mxu0 0
  %257 = vmatprep.subr.bf16.mxu0 0
  %258 = vmatpush2.bf16.msra.mxu0 0
  %259 = vmatprep.subr.bf16.mxu0 0
  %260 = vmatpush2.bf16.msra.mxu0 0
  %261 = vmatprep.subr.bf16.mxu0 0
  %262 = vmatpush2.bf16.msra.mxu0 0
  %263 = vmatprep.subr.bf16.mxu0 0
  %264 = vmatpush2.bf16.msra.mxu0 0
  %265 = vmatprep.subr.bf16.mxu0 0
  %266 = vmatpush2.bf16.msra.mxu0 0
  %267 = vmatprep.subr.bf16.mxu0 0
  %268 = vmatpush2.bf16.msra.mxu0 0
  %269 = vmatprep.mubr.bf16.mxu0 0
  %270 = vmatmul.mubr.bf16.gmra.mxu0 %v44
  %v271 = vpop.f32.mrf.mxu0
  %v272 = vadd.f32 0.0, %v271
  %v273 = vpop.f32.mrf.mxu0
  %v274 = vadd.f32 0.0, %v273
  %v275 = vpop.f32.mrf.mxu0
  %v276 = vadd.f32 0.0, %v275
  %v277 = vpop.f32.mrf.mxu0
  %v278 = vadd.f32 0.0, %v277
  %279 = vdwg.mxu0
  %280 = vmatprep.subr.bf16.mxu0 %v204
  %281 = vmatpush1.bf16.msra.mxu0 %v203
  %282 = vmatprep.subr.bf16.mxu0 %v200
  %283 = vmatpush1.bf16.msra.mxu0 %v199
  %284 = vmatprep.subr.bf16.mxu0 %v196
  %285 = vmatpush1.bf16.msra.mxu0 %v195
  %286 = vmatprep.subr.bf16.mxu0 %v192
  %287 = vmatpush1.bf16.msra.mxu0 %v191
  %288 = vmatprep.subr.bf16.mxu0 %v188
  %289 = vmatpush1.bf16.msra.mxu0 %v187
  %290 = vmatprep.subr.bf16.mxu0 %v184
  %291 = vmatpush1.bf16.msra.mxu0 %v183
  %292 = vmatprep.subr.bf16.mxu0 %v180
  %293 = vmatpush1.bf16.msra.mxu0 %v179
  %294 = vmatprep.subr.bf16.mxu0 %v176
  %295 = vmatpush1.bf16.msra.mxu0 %v175
  %296 = vmatprep.subr.bf16.mxu0 0
  %297 = vmatpush2.bf16.msra.mxu0 0
  %298 = vmatprep.subr.bf16.mxu0 0
  %299 = vmatpush2.bf16.msra.mxu0 0
  %300 = vmatprep.subr.bf16.mxu0 0
  %301 = vmatpush2.bf16.msra.mxu0 0
  %302 = vmatprep.subr.bf16.mxu0 0
  %303 = vmatpush2.bf16.msra.mxu0 0
  %304 = vmatprep.subr.bf16.mxu0 0
  %305 = vmatpush2.bf16.msra.mxu0 0
  %306 = vmatprep.subr.bf16.mxu0 0
  %307 = vmatpush2.bf16.msra.mxu0 0
  %308 = vmatprep.subr.bf16.mxu0 0
  %309 = vmatpush2.bf16.msra.mxu0 0
  %310 = vmatprep.subr.bf16.mxu0 0
  %311 = vmatpush2.bf16.msra.mxu0 0
  %312 = vmatprep.mubr.bf16.mxu0 0
  %313 = vmatmul.mubr.bf16.gmra.mxu0 %v44
  %v314 = vpop.f32.mrf.mxu0
  %v315 = vadd.f32 0.0, %v314
  %v316 = vpop.f32.mrf.mxu0
  %v317 = vadd.f32 0.0, %v316
  %v318 = vpop.f32.mrf.mxu0
  %v319 = vadd.f32 0.0, %v318
  %v320 = vpop.f32.mrf.mxu0
  %v321 = vadd.f32 0.0, %v320
  %322 = vdwg.mxu0
  %v323 = vmul.f32 %v272, 0.5
  %v324 = vmul.f32 %v274, 0.5
  %v325 = vmul.f32 %v276, 0.5
  %v326 = vmul.f32 %v278, 0.5
  %v327 = vmul.f32 %v272, 0.044715
  %v328 = vmul.f32 %v274, 0.044715
  %v329 = vmul.f32 %v276, 0.044715
  %v330 = vmul.f32 %v278, 0.044715
  %v331 = vmul.f32 %v327, %v272
  %v332 = vmul.f32 %v328, %v274
  %v333 = vmul.f32 %v329, %v276
  %v334 = vmul.f32 %v330, %v278
  %v335 = vmul.f32 %v331, %v272
  %v336 = vmul.f32 %v332, %v274
  %v337 = vmul.f32 %v333, %v276
  %v338 = vmul.f32 %v334, %v278
  %v339 = vadd.f32 %v272, %v335
  %v340 = vadd.f32 %v274, %v336
  %v341 = vadd.f32 %v276, %v337
  %v342 = vadd.f32 %v278, %v338
  %v343 = vmul.f32 %v339, 0.7978846
  %v344 = vmul.f32 %v340, 0.7978846
  %v345 = vmul.f32 %v341, 0.7978846
  %v346 = vmul.f32 %v342, 0.7978846
  %v347 = vtanh.pop %v343
  %v348 = vtanh.pop %v344
  %v349 = vtanh.pop %v345
  %v350 = vtanh.pop %v346
  %v351 = vadd.f32 %v347, 1.0
  %v352 = vadd.f32 %v348, 1.0
  %v353 = vadd.f32 %v349, 1.0
  %v354 = vadd.f32 %v350, 1.0
  %v355 = vmul.f32 %v323, %v351
  %v356 = vmul.f32 %v324, %v352
  %v357 = vmul.f32 %v325, %v353
  %v358 = vmul.f32 %v326, %v354
  %v359 = vmul.f32 %v355, %v315
  %v360 = vmul.f32 %v356, %v317
  %v361 = vmul.f32 %v357, %v319
  %v362 = vmul.f32 %v358, %v321
  %v363 = vpack.c.bf16 %v361, %v359
  %v364 = vpack.c.bf16 %v362, %v360
  %v365 = vld [vmem:[%s3] sm:$0xf]
  %v366 = vld [vmem:[%s3 + $0x4] sm:$0xf]
  %v367 = vld [vmem:[%s3 + $0x8] sm:$0xf]
  %v368 = vld [vmem:[%s3 + $0xc] sm:$0xf]
  %v369 = vld [vmem:[%s3 + $0x10] sm:$0xf]
  %v370 = vld [vmem:[%s3 + $0x14] sm:$0xf]
  %v371 = vld [vmem:[%s3 + $0x18] sm:$0xf]
  %v372 = vld [vmem:[%s3 + $0x1c] sm:$0xf]
  %v373 = vld [vmem:[%s3 + $0x20] sm:$0xf]
  %v374 = vld [vmem:[%s3 + $0x24] sm:$0xf]
  %v375 = vld [vmem:[%s3 + $0x28] sm:$0xf]
  %v376 = vld [vmem:[%s3 + $0x2c] sm:$0xf]
  %v377 = vld [vmem:[%s3 + $0x30] sm:$0xf]
  %v378 = vld [vmem:[%s3 + $0x34] sm:$0xf]
  %v379 = vld [vmem:[%s3 + $0x38] sm:$0xf]
  %v380 = vld [vmem:[%s3 + $0x3c] sm:$0xf]
  %v381 = vld [vmem:[%s3 + $0x40] sm:$0xf]
  %v382 = vld [vmem:[%s3 + $0x44] sm:$0xf]
  %v383 = vld [vmem:[%s3 + $0x48] sm:$0xf]
  %v384 = vld [vmem:[%s3 + $0x4c] sm:$0xf]
  %v385 = vld [vmem:[%s3 + $0x50] sm:$0xf]
  %v386 = vld [vmem:[%s3 + $0x54] sm:$0xf]
  %v387 = vld [vmem:[%s3 + $0x58] sm:$0xf]
  %v388 = vld [vmem:[%s3 + $0x5c] sm:$0xf]
  %v389 = vld [vmem:[%s3 + $0x60] sm:$0xf]
  %v390 = vld [vmem:[%s3 + $0x64] sm:$0xf]
  %v391 = vld [vmem:[%s3 + $0x68] sm:$0xf]
  %v392 = vld [vmem:[%s3 + $0x6c] sm:$0xf]
  %v393 = vld [vmem:[%s3 + $0x70] sm:$0xf]
  %v394 = vld [vmem:[%s3 + $0x74] sm:$0xf]
  %v395 = vld [vmem:[%s3 + $0x78] sm:$0xf]
  %v396 = vld [vmem:[%s3 + $0x7c] sm:$0xf]
  %v429 = vunpack.c.l.b16 %v365
  %v430 = vunpack.c.l.b16 %v366
  %v431 = vunpack.c.l.b16 %v367
  %v432 = vunpack.c.l.b16 %v368
  %v433 = vunpack.c.l.b16 %v369
  %v434 = vunpack.c.l.b16 %v370
  %v435 = vunpack.c.l.b16 %v371
  %v436 = vunpack.c.l.b16 %v372
  %v437 = vunpack.c.l.b16 %v373
  %v438 = vunpack.c.l.b16 %v374
  %v439 = vunpack.c.l.b16 %v375
  %v440 = vunpack.c.l.b16 %v376
  %v441 = vunpack.c.l.b16 %v377
  %v442 = vunpack.c.l.b16 %v378
  %v443 = vunpack.c.l.b16 %v379
  %v444 = vunpack.c.l.b16 %v380
  %v445 = vunpack.c.l.b16 %v381
  %v446 = vunpack.c.l.b16 %v382
  %v447 = vunpack.c.l.b16 %v383
  %v448 = vunpack.c.l.b16 %v384
  %v449 = vunpack.c.l.b16 %v385
  %v450 = vunpack.c.l.b16 %v386
  %v451 = vunpack.c.l.b16 %v387
  %v452 = vunpack.c.l.b16 %v388
  %v453 = vunpack.c.l.b16 %v389
  %v454 = vunpack.c.l.b16 %v390
  %v455 = vunpack.c.l.b16 %v391
  %v456 = vunpack.c.l.b16 %v392
  %v457 = vunpack.c.l.b16 %v393
  %v458 = vunpack.c.l.b16 %v394
  %v459 = vunpack.c.l.b16 %v395
  %v460 = vunpack.c.l.b16 %v396
  %v461 = vpack.c.b16 %v430, %v429
  %v462 = vpack.c.b16 %v432, %v431
  %v463 = vpack.c.b16 %v434, %v433
  %v464 = vpack.c.b16 %v436, %v435
  %v465 = vpack.c.b16 %v438, %v437
  %v466 = vpack.c.b16 %v440, %v439
  %v467 = vpack.c.b16 %v442, %v441
  %v468 = vpack.c.b16 %v444, %v443
  %v469 = vpack.c.b16 %v446, %v445
  %v470 = vpack.c.b16 %v448, %v447
  %v471 = vpack.c.b16 %v450, %v449
  %v472 = vpack.c.b16 %v452, %v451
  %v473 = vpack.c.b16 %v454, %v453
  %v474 = vpack.c.b16 %v456, %v455
  %v475 = vpack.c.b16 %v458, %v457
  %v476 = vpack.c.b16 %v460, %v459
  %493 = vmatprep.subr.bf16.mxu0 0
  %494 = vmatpush1.bf16.msra.mxu0 %v468
  %495 = vmatprep.subr.bf16.mxu0 0
  %496 = vmatpush1.bf16.msra.mxu0 %v467
  %497 = vmatprep.subr.bf16.mxu0 0
  %498 = vmatpush1.bf16.msra.mxu0 %v466
  %499 = vmatprep.subr.bf16.mxu0 0
  %500 = vmatpush1.bf16.msra.mxu0 %v465
  %501 = vmatprep.subr.bf16.mxu0 0
  %502 = vmatpush1.bf16.msra.mxu0 %v464
  %503 = vmatprep.subr.bf16.mxu0 0
  %504 = vmatpush1.bf16.msra.mxu0 %v463
  %505 = vmatprep.subr.bf16.mxu0 0
  %506 = vmatpush1.bf16.msra.mxu0 %v462
  %507 = vmatprep.subr.bf16.mxu0 0
  %508 = vmatpush1.bf16.msra.mxu0 %v461
  %509 = vmatprep.subr.bf16.mxu0 0
  %510 = vmatpush2.bf16.msra.mxu0 %v476
  %511 = vmatprep.subr.bf16.mxu0 0
  %512 = vmatpush2.bf16.msra.mxu0 %v475
  %513 = vmatprep.subr.bf16.mxu0 0
  %514 = vmatpush2.bf16.msra.mxu0 %v474
  %515 = vmatprep.subr.bf16.mxu0 0
  %516 = vmatpush2.bf16.msra.mxu0 %v473
  %517 = vmatprep.subr.bf16.mxu0 0
  %518 = vmatpush2.bf16.msra.mxu0 %v472
  %519 = vmatprep.subr.bf16.mxu0 0
  %520 = vmatpush2.bf16.msra.mxu0 %v471
  %521 = vmatprep.subr.bf16.mxu0 0
  %522 = vmatpush2.bf16.msra.mxu0 %v470
  %523 = vmatprep.subr.bf16.mxu0 0
  %524 = vmatpush2.bf16.msra.mxu0 %v469
  %525 = vmatprep.mubr.bf16.mxu0 %v364
  %526 = vmatmul.mubr.bf16.gmra.mxu0 %v363
  %v527 = vpop.f32.mrf.mxu0
  %v528 = vadd.f32 0.0, %v527
  %v529 = vpop.f32.mrf.mxu0
  %v530 = vpop.f32.mrf.mxu0
  %v531 = vadd.f32 0.0, %v530
  %v532 = vpop.f32.mrf.mxu0
  %533 = vdwg.mxu0
  %v534 = vadd.f32 %v18, %v528
  %v535 = vadd.f32 %v19, %v531
  %536 = vst [vmem:[%s4] sm:$0xff] %v534
  %537 = vst [vmem:[%s4 + $0x8] sm:$0xff] %v535
  // Predicated region
  $region18: #{t5_encoder_forward.9} parent=0 // pred_check
    _
  $region19: #{t5_encoder_forward.9} parent=0 // pred_check_branch
    %539 = sbr.rel (0) target = $region21
  $region20: #{t5_encoder_forward.9} parent=0 // pred_region
    _
  $region21: #{t5_encoder_forward.9} parent=0 // pred_fallthru
    _
  // Predicated region
  $region22: #{t5_encoder_forward.9} parent=0 // pred_check
    _
  $region23: #{t5_encoder_forward.9} parent=0 // pred_check_branch
    %541 = sbr.rel (0) target = $region25
  $region24: #{t5_encoder_forward.9} parent=0 // pred_region
    _
  $region25: #{t5_encoder_forward.9} parent=0 // pred_fallthru
    _

</llo_original>
